<compile_context>
chip_gen: v5e
topology: v5e:2x2
jax: 0.10.0
libtpu: 0.0.40
codegen_flags: <defaults>
</compile_context>

<pallas_src>
import jax
import jax.numpy as jnp
import numpy as np
from jax.experimental import pallas as pl
from jax.experimental.pallas import tpu as pltpu

# ---------------- configuration (small shapes consistent with the module) ------
B = 2              # batch
C = 128            # backbone feature channels (real model: 2048)
H = W = 8          # backbone feature spatial size (real model: 7x7)
HW = H * W
BHW = B * HW
NUM_CLASS = 5
K = 5
KC = NUM_CLASS * K            # CategoryAttentionBlock conv output channels (25)
DIV_CLASS = (2, 2, 3)         # sum(div) - (len-1) == NUM_CLASS
NSUM = sum(DIV_CLASS)         # 7 logits total
NPAD = 128                    # lane-padded classifier logit width
BN_EPS = 1e-5


# ---------------- static tables (built once with numpy, no runtime cost) -------
def _build_static_tables():
    # For a per-batch NCHW-contiguous F1 (KC, H, W), the literal
    # F1.view(H, W, classes, k) reads flat index n = c*HW + hw at view position
    # (hw // ..., j = n mod KC).  The attention map is
    #   M[p] = (1/(classes*k)) * sum_j S[j//K] * flat[KC*p + j]
    # which we decompose over the (hw, c) grid of the kernel-layout f1 (HW, KC):
    #   p    = (c*HW + hw) // KC = p0(c) + kseg(hw, c)
    #   smap = ((c*HW + hw) % KC) // K
    hw = np.arange(HW).reshape(HW, 1)
    cc = np.arange(KC).reshape(1, KC)
    n = cc * HW + hw                              # (HW, KC) flat NCHW index
    smap = (n % KC) // K                          # class-group of each element
    p0 = (np.arange(KC) * HW) // KC               # (KC,)
    off = (np.arange(KC) * HW) % KC               # (KC,)
    kseg = (off.reshape(1, KC) + hw) // KC        # (HW, KC), values in [0, nkseg)
    nkseg = int(kseg.max()) + 1

    smk = np.stack([(smap == s).astype(np.float32) for s in range(NUM_CLASS)], 0)
    mk = np.stack([(kseg == k).astype(np.float32) for k in range(nkseg)], 0)
    dmat = np.zeros((nkseg, KC, HW), np.float32)
    for k in range(nkseg):
        for c in range(KC):
            pp = int(p0[c]) + k
            if pp < HW:
                dmat[k, c, pp] = 1.0

    # batch pooling / broadcast helpers (batch collapsed into the sublane axis)
    pavg = np.zeros((B, BHW), np.float32)
    bexp = np.zeros((BHW, B), np.float32)
    for b in range(B):
        pavg[b, b * HW:(b + 1) * HW] = 1.0 / HW
        bexp[b * HW:(b + 1) * HW, b] = 1.0

    # per-head softmax segment matrix + valid-lane mask over the padded logits
    segm = np.zeros((NPAD, NPAD), np.float32)
    vmask = np.zeros((1, NPAD), np.float32)
    o = 0
    for d in DIV_CLASS:
        segm[o:o + d, o:o + d] = 1.0
        vmask[0, o:o + d] = 1.0
        o += d

    to_j = jnp.asarray
    return (to_j(smk), to_j(mk), to_j(dmat), to_j(pavg), to_j(bexp),
            to_j(segm), to_j(vmask), nkseg)


SMK_T, MK_T, D_T, PAVG_T, BEXP_T, SEGM_T, VMASK_T, NKSEG = _build_static_tables()


# ---------------- the fused kernel ----------------------------------------------
def cabnet_kernel(feat_ref, pavg_ref, bexp_ref,
                  w1t_ref, b1_ref, w2t_ref, b2_ref,
                  wct_ref, bnsc_ref, bnsh_ref, gmat_ref,
                  smk_ref, mk_ref, dmat_ref,
                  wcat_ref, bcat_ref, segm_ref, vmask_ref,
                  out_ref):
    x = feat_ref[...]                                                   # (B*HW, C)

    # ---- GlobalAttentionBlock (batched over B) ----
    pooled = jnp.dot(pavg_ref[...], x,
                     preferred_element_type=jnp.float32)                # (B, C) avg pool
    h = jnp.maximum(
        jnp.dot(pooled, w1t_ref[...], preferred_element_type=jnp.float32)
        + b1_ref[...], 0.0)                                             # conv1 + relu
    g = jax.nn.sigmoid(
        jnp.dot(h, w2t_ref[...], preferred_element_type=jnp.float32)
        + b2_ref[...])                                                  # conv2 + sigmoid
    c_a = x * jnp.dot(bexp_ref[...], g,
                      preferred_element_type=jnp.float32)               # channel attention
    s_a = jax.nn.sigmoid(jnp.mean(c_a, axis=1, keepdims=True))          # spatial gate
    y = c_a * s_a                                                       # S_A  (B*HW, C)

    # ---- CategoryAttentionBlock: 1x1 conv + BN(eval, folded) + ReLU ----
    a = jnp.dot(y, wct_ref[...], preferred_element_type=jnp.float32)    # (B*HW, KC)
    f1 = jnp.maximum(a * bnsc_ref[...] + bnsh_ref[...], 0.0)

    # ---- per-batch: S, NCHW-view attention map M, GAP of semantic ----
    z_rows = []
    for b in range(B):
        f1_b = f1[b * HW:(b + 1) * HW, :]                               # (HW, KC)
        y_b = y[b * HW:(b + 1) * HW, :]                                 # (HW, C)
        mx = jnp.max(f1_b, axis=0, keepdims=True)                       # global max pool
        s_b = jnp.dot(mx, gmat_ref[...],
                      preferred_element_type=jnp.float32)               # (1, classes) = S
        s_full = jnp.broadcast_to(s_b, (HW, NUM_CLASS))
        wgt = jnp.zeros((HW, KC), jnp.float32)
        for s in range(NUM_CLASS):                                      # W[hw,c] = S[smap]
            wgt = wgt + s_full[:, s:s + 1] * smk_ref[s]
        fw = f1_b * wgt
        m_row = jnp.zeros((1, HW), jnp.float32)                         # un-normalized M
        for k in range(NKSEG):
            rs = jnp.sum(fw * mk_ref[k], axis=0, keepdims=True)         # (1, KC)
            m_row = m_row + jnp.dot(rs, dmat_ref[k],
                                    preferred_element_type=jnp.float32)
        # GAP(semantic) = (M @ y) / HW   (normalization folded in below)
        z_rows.append(jnp.dot(m_row, y_b, preferred_element_type=jnp.float32))
    z = jnp.concatenate(z_rows, axis=0) * (1.0 / (HW * NUM_CLASS * K))  # (B, C)

    # ---- classerNew head: packed linear + per-group softmax (lane-dense) ----
    logits = (jnp.dot(z, wcat_ref[...], preferred_element_type=jnp.float32)
              + bcat_ref[...])                                          # (B, NPAD)
    v = vmask_ref[...]
    lm = logits * v - 1e30 * (1.0 - v)
    mrow = jnp.max(lm, axis=1, keepdims=True)
    e = jnp.exp(lm - mrow) * v
    denom = jnp.dot(e, segm_ref[...], preferred_element_type=jnp.float32) + (1.0 - v)
    out_ref[...] = e / denom                                            # zeros on pad lanes


# ---------------- wrapper -------------------------------------------------------
def _spec(shape):
    nd = len(shape)
    return pl.BlockSpec(tuple(shape), lambda i, _nd=nd: (0,) * _nd)


def cabnetpp_forward(x_nchw, p):
    feat = jnp.transpose(x_nchw, (0, 2, 3, 1)).reshape(BHW, C)

    args = (feat, PAVG_T, BEXP_T,
            p["w1t"], p["b1"], p["w2t"], p["b2"],
            p["wct"], p["bn_scale"], p["bn_shift"], p["gmat"],
            SMK_T, MK_T, D_T,
            p["wcat"], p["bcat"], SEGM_T, VMASK_T)

    out = pl.pallas_call(
        cabnet_kernel,
        grid=(1,),
        in_specs=[_spec(a.shape) for a in args],
        out_specs=_spec((B, NPAD)),
        out_shape=jax.ShapeDtypeStruct((B, NPAD), jnp.float32),
        compiler_params=pltpu.CompilerParams(dimension_semantics=("arbitrary",)),
    )(*args)

    res, off = [], 0
    for d in DIV_CLASS:                                                 # already softmaxed
        res.append(out[:, off:off + d])
        off += d
    return res


# ---------------- deterministic parameter init ----------------------------------
def init_params(key):
    ks = jax.random.split(key, 16)
    sc = 0.05
    raw = {
        "w1": jax.random.normal(ks[0], (C, C), jnp.float32) * sc,     # GA conv1 [out,in]
        "b1": jax.random.normal(ks[1], (C,), jnp.float32) * sc,
        "w2": jax.random.normal(ks[2], (C, C), jnp.float32) * sc,     # GA conv2 [out,in]
        "b2": jax.random.normal(ks[3], (C,), jnp.float32) * sc,
        "wc": jax.random.normal(ks[4], (KC, C), jnp.float32) * sc,    # CA conv  [out,in]
        "bc": jax.random.normal(ks[5], (KC,), jnp.float32) * sc,
        "bn_gamma": 1.0 + 0.1 * jax.random.normal(ks[6], (KC,), jnp.float32),
        "bn_beta": 0.1 * jax.random.normal(ks[7], (KC,), jnp.float32),
        "bn_mean": 0.1 * jax.random.normal(ks[8], (KC,), jnp.float32),
        "bn_var": 0.5 + 0.5 * jnp.abs(jax.random.normal(ks[9], (KC,), jnp.float32)),
        "lin_w": [jax.random.normal(ks[10 + i], (d, C), jnp.float32) * sc
                  for i, d in enumerate(DIV_CLASS)],
        "lin_b": [jax.random.normal(ks[13 + i], (d,), jnp.float32) * sc
                  for i, d in enumerate(DIV_CLASS)],
    }
    inv = 1.0 / jnp.sqrt(raw["bn_var"] + BN_EPS)
    bn_scale = raw["bn_gamma"] * inv
    bn_shift = (raw["bc"] - raw["bn_mean"]) * bn_scale + raw["bn_beta"]
    gmat = (jnp.arange(KC)[:, None] // K
            == jnp.arange(NUM_CLASS)[None, :]).astype(jnp.float32) / K
    wcat = jnp.zeros((C, NPAD), jnp.float32)
    bcat = jnp.zeros((1, NPAD), jnp.float32)
    off = 0
    for wl, bl in zip(raw["lin_w"], raw["lin_b"]):
        d = wl.shape[0]
        wcat = wcat.at[:, off:off + d].set(wl.T)
        bcat = bcat.at[:, off:off + d].set(bl[None, :])
        off += d
    kparams = {
        "w1t": raw["w1"].T, "b1": raw["b1"][None, :],
        "w2t": raw["w2"].T, "b2": raw["b2"][None, :],
        "wct": raw["wc"].T,
        "bn_scale": bn_scale[None, :], "bn_shift": bn_shift[None, :],
        "gmat": gmat, "wcat": wcat, "bcat": bcat,
    }
    return raw, kparams


# ---------------- pure-JAX NCHW reference (mirrors the PyTorch forward) ---------
def reference_forward(x, p):
    pooled = jnp.mean(x, axis=(2, 3))                                   # GA avgpool
    h = jnp.maximum(pooled @ p["w1"].T + p["b1"], 0.0)
    g = jax.nn.sigmoid(h @ p["w2"].T + p["b2"])
    c_a = g[:, :, None, None] * x
    s_a = jax.nn.sigmoid(jnp.mean(c_a, axis=1, keepdims=True))
    y = s_a * c_a                                                       # (B, C, H, W)

    a = jnp.einsum("oc,bchw->bohw", p["wc"], y) + p["bc"][None, :, None, None]
    a = ((a - p["bn_mean"][None, :, None, None])
         / jnp.sqrt(p["bn_var"] + BN_EPS)[None, :, None, None]
         * p["bn_gamma"][None, :, None, None] + p["bn_beta"][None, :, None, None])
    f1 = jnp.maximum(a, 0.0)                                            # (B, KC, H, W)
    mx = jnp.max(f1, axis=(2, 3))                                       # (B, KC)
    s = jnp.mean(mx.reshape(B, NUM_CLASS, K), axis=-1)                  # (B, classes)
    xv = f1.reshape(B, H, W, NUM_CLASS, K)      # literal .view on contiguous NCHW memory
    xm = jnp.mean(xv, axis=-1)
    xm = s[:, None, None, :] * xm
    m = jnp.mean(xm, axis=-1, keepdims=True)
    m = jnp.transpose(m, (0, 3, 1, 2))                                  # (B,1,H,W)
    sem = y * m

    z = jnp.mean(sem, axis=(2, 3))                                      # classifier GAP
    res = []
    for wl, bl in zip(p["lin_w"], p["lin_b"]):
        res.append(jax.nn.softmax(z @ wl.T + bl, axis=1))
    return res


if __name__ == "__main__":
    key = jax.random.PRNGKey(0)
    kx, kp = jax.random.split(key)
    x = jax.random.normal(kx, (B, C, H, W), jnp.float32)   # backbone feature map (NCHW)
    raw, kparams = init_params(kp)

    fwd = jax.jit(cabnetpp_forward)
    out = fwd(x, kparams)
    out = jax.block_until_ready(out)

    ref = reference_forward(x, raw)
    for o, r in zip(out, ref):
        np.testing.assert_allclose(np.asarray(o), np.asarray(r), atol=2e-3, rtol=2e-3)

    print("KERNEL_OK")
</pallas_src>

<mosaic_0001>
module attributes {stable_mosaic.version = 11 : i64} {
  func.func @cabnet_kernel(%arg0: i32, %arg1: memref<128x128xf32, #tpu.memory_space<vmem>>, %arg2: memref<2x128xf32, #tpu.memory_space<vmem>>, %arg3: memref<128x2xf32, #tpu.memory_space<vmem>>, %arg4: memref<128x128xf32, #tpu.memory_space<vmem>>, %arg5: memref<1x128xf32, #tpu.memory_space<vmem>>, %arg6: memref<128x128xf32, #tpu.memory_space<vmem>>, %arg7: memref<1x128xf32, #tpu.memory_space<vmem>>, %arg8: memref<128x25xf32, #tpu.memory_space<vmem>>, %arg9: memref<1x25xf32, #tpu.memory_space<vmem>>, %arg10: memref<1x25xf32, #tpu.memory_space<vmem>>, %arg11: memref<25x5xf32, #tpu.memory_space<vmem>>, %arg12: memref<5x64x25xf32, #tpu.memory_space<vmem>>, %arg13: memref<4x64x25xf32, #tpu.memory_space<vmem>>, %arg14: memref<4x25x64xf32, #tpu.memory_space<vmem>>, %arg15: memref<128x128xf32, #tpu.memory_space<vmem>>, %arg16: memref<1x128xf32, #tpu.memory_space<vmem>>, %arg17: memref<128x128xf32, #tpu.memory_space<vmem>>, %arg18: memref<1x128xf32, #tpu.memory_space<vmem>>, %arg19: memref<2x128xf32, #tpu.memory_space<vmem>>) attributes {dimension_semantics = [#tpu.dimension_semantics<arbitrary>], iteration_bounds = array<i64: 1>, scalar_prefetch = 0 : i64, scratch_operands = 0 : i64, tpu.core_type = #tpu.core_type<tc>, window_params = [{pipeline_mode = #tpu.pipeline_mode<synchronous>, transform_indices = @transform_0, window_bounds = array<i64: 128, 128>}, {pipeline_mode = #tpu.pipeline_mode<synchronous>, transform_indices = @transform_1, window_bounds = array<i64: 2, 128>}, {pipeline_mode = #tpu.pipeline_mode<synchronous>, transform_indices = @transform_2, window_bounds = array<i64: 128, 2>}, {pipeline_mode = #tpu.pipeline_mode<synchronous>, transform_indices = @transform_3, window_bounds = array<i64: 128, 128>}, {pipeline_mode = #tpu.pipeline_mode<synchronous>, transform_indices = @transform_4, window_bounds = array<i64: 1, 128>}, {pipeline_mode = #tpu.pipeline_mode<synchronous>, transform_indices = @transform_5, window_bounds = array<i64: 128, 128>}, {pipeline_mode = #tpu.pipeline_mode<synchronous>, transform_indices = @transform_6, window_bounds = array<i64: 1, 128>}, {pipeline_mode = #tpu.pipeline_mode<synchronous>, transform_indices = @transform_7, window_bounds = array<i64: 128, 25>}, {pipeline_mode = #tpu.pipeline_mode<synchronous>, transform_indices = @transform_8, window_bounds = array<i64: 1, 25>}, {pipeline_mode = #tpu.pipeline_mode<synchronous>, transform_indices = @transform_9, window_bounds = array<i64: 1, 25>}, {pipeline_mode = #tpu.pipeline_mode<synchronous>, transform_indices = @transform_10, window_bounds = array<i64: 25, 5>}, {pipeline_mode = #tpu.pipeline_mode<synchronous>, transform_indices = @transform_11, window_bounds = array<i64: 5, 64, 25>}, {pipeline_mode = #tpu.pipeline_mode<synchronous>, transform_indices = @transform_12, window_bounds = array<i64: 4, 64, 25>}, {pipeline_mode = #tpu.pipeline_mode<synchronous>, transform_indices = @transform_13, window_bounds = array<i64: 4, 25, 64>}, {pipeline_mode = #tpu.pipeline_mode<synchronous>, transform_indices = @transform_14, window_bounds = array<i64: 128, 128>}, {pipeline_mode = #tpu.pipeline_mode<synchronous>, transform_indices = @transform_15, window_bounds = array<i64: 1, 128>}, {pipeline_mode = #tpu.pipeline_mode<synchronous>, transform_indices = @transform_16, window_bounds = array<i64: 128, 128>}, {pipeline_mode = #tpu.pipeline_mode<synchronous>, transform_indices = @transform_17, window_bounds = array<i64: 1, 128>}, {pipeline_mode = #tpu.pipeline_mode<synchronous>, transform_indices = @transform_18, window_bounds = array<i64: 2, 128>}]} {
    %c0 = arith.constant 0 : index
    %c0_0 = arith.constant 0 : index
    %0 = vector.load %arg1[%c0, %c0_0] : memref<128x128xf32, #tpu.memory_space<vmem>>, vector<128x128xf32>
    %c0_1 = arith.constant 0 : index
    %c0_2 = arith.constant 0 : index
    %1 = vector.load %arg2[%c0_1, %c0_2] : memref<2x128xf32, #tpu.memory_space<vmem>>, vector<2x128xf32>
    %cst = arith.constant dense<0.000000e+00> : vector<2x128xf32>
    %2 = tpu.matmul %1, %0, %cst {dimension_numbers = #tpu.dot_dimension_numbers<[1], [0], [0], [1], [0, 0, 1, 1], [], []>} : vector<2x128xf32>, vector<128x128xf32>, vector<2x128xf32> -> vector<2x128xf32>
    %c0_3 = arith.constant 0 : index
    %c0_4 = arith.constant 0 : index
    %3 = vector.load %arg4[%c0_3, %c0_4] : memref<128x128xf32, #tpu.memory_space<vmem>>, vector<128x128xf32>
    %cst_5 = arith.constant dense<0.000000e+00> : vector<2x128xf32>
    %4 = tpu.matmul %2, %3, %cst_5 {dimension_numbers = #tpu.dot_dimension_numbers<[1], [0], [0], [1], [0, 0, 1, 1], [], []>} : vector<2x128xf32>, vector<128x128xf32>, vector<2x128xf32> -> vector<2x128xf32>
    %c0_6 = arith.constant 0 : index
    %c0_7 = arith.constant 0 : index
    %5 = vector.load %arg5[%c0_6, %c0_7] : memref<1x128xf32, #tpu.memory_space<vmem>>, vector<1x128xf32>
    %6 = vector.broadcast %5 : vector<1x128xf32> to vector<2x128xf32>
    %7 = arith.addf %4, %6 : vector<2x128xf32>
    %cst_8 = arith.constant 0.000000e+00 : f32
    %8 = vector.broadcast %cst_8 : f32 to vector<2x128xf32>
    %9 = arith.maximumf %7, %8 : vector<2x128xf32>
    %c0_9 = arith.constant 0 : index
    %c0_10 = arith.constant 0 : index
    %10 = vector.load %arg6[%c0_9, %c0_10] : memref<128x128xf32, #tpu.memory_space<vmem>>, vector<128x128xf32>
    %cst_11 = arith.constant dense<0.000000e+00> : vector<2x128xf32>
    %11 = tpu.matmul %9, %10, %cst_11 {dimension_numbers = #tpu.dot_dimension_numbers<[1], [0], [0], [1], [0, 0, 1, 1], [], []>} : vector<2x128xf32>, vector<128x128xf32>, vector<2x128xf32> -> vector<2x128xf32>
    %c0_12 = arith.constant 0 : index
    %c0_13 = arith.constant 0 : index
    %12 = vector.load %arg7[%c0_12, %c0_13] : memref<1x128xf32, #tpu.memory_space<vmem>>, vector<1x128xf32>
    %13 = vector.broadcast %12 : vector<1x128xf32> to vector<2x128xf32>
    %14 = arith.addf %11, %13 : vector<2x128xf32>
    %15 = arith.negf %14 : vector<2x128xf32>
    %16 = math.exp %15 : vector<2x128xf32>
    %cst_14 = arith.constant 1.000000e+00 : f32
    %17 = vector.broadcast %cst_14 : f32 to vector<2x128xf32>
    %18 = arith.addf %17, %16 : vector<2x128xf32>
    %19 = arith.divf %17, %18 : vector<2x128xf32>
    %c0_15 = arith.constant 0 : index
    %c0_16 = arith.constant 0 : index
    %20 = vector.load %arg3[%c0_15, %c0_16] : memref<128x2xf32, #tpu.memory_space<vmem>>, vector<128x2xf32>
    %cst_17 = arith.constant dense<0.000000e+00> : vector<128x128xf32>
    %21 = tpu.matmul %20, %19, %cst_17 {dimension_numbers = #tpu.dot_dimension_numbers<[1], [0], [0], [1], [0, 0, 1, 1], [], []>} : vector<128x2xf32>, vector<2x128xf32>, vector<128x128xf32> -> vector<128x128xf32>
    %22 = arith.mulf %0, %21 : vector<128x128xf32>
    %cst_18 = arith.constant dense<0.000000e+00> : vector<128xf32>
    %23 = vector.multi_reduction <add>, %22, %cst_18 [1] : vector<128x128xf32> to vector<128xf32>
    %24 = vector.shape_cast %23 : vector<128xf32> to vector<128x1xf32>
    %cst_19 = arith.constant 1.280000e+02 : f32
    %25 = vector.broadcast %cst_19 : f32 to vector<128x1xf32>
    %26 = arith.divf %24, %25 : vector<128x1xf32>
    %27 = arith.negf %26 : vector<128x1xf32>
    %28 = math.exp %27 : vector<128x1xf32>
    %cst_20 = arith.constant 1.000000e+00 : f32
    %29 = vector.broadcast %cst_20 : f32 to vector<128x1xf32>
    %30 = arith.addf %29, %28 : vector<128x1xf32>
    %31 = arith.divf %29, %30 : vector<128x1xf32>
    %32 = vector.broadcast %31 : vector<128x1xf32> to vector<128x128xf32>
    %33 = arith.mulf %22, %32 : vector<128x128xf32>
    %c0_21 = arith.constant 0 : index
    %c0_22 = arith.constant 0 : index
    %34 = vector.load %arg8[%c0_21, %c0_22] : memref<128x25xf32, #tpu.memory_space<vmem>>, vector<128x25xf32>
    %cst_23 = arith.constant dense<0.000000e+00> : vector<128x25xf32>
    %35 = tpu.matmul %33, %34, %cst_23 {dimension_numbers = #tpu.dot_dimension_numbers<[1], [0], [0], [1], [0, 0, 1, 1], [], []>} : vector<128x128xf32>, vector<128x25xf32>, vector<128x25xf32> -> vector<128x25xf32>
    %c0_24 = arith.constant 0 : index
    %c0_25 = arith.constant 0 : index
    %36 = vector.load %arg9[%c0_24, %c0_25] : memref<1x25xf32, #tpu.memory_space<vmem>>, vector<1x25xf32>
    %37 = vector.broadcast %36 : vector<1x25xf32> to vector<128x25xf32>
    %38 = arith.mulf %35, %37 : vector<128x25xf32>
    %c0_26 = arith.constant 0 : index
    %c0_27 = arith.constant 0 : index
    %39 = vector.load %arg10[%c0_26, %c0_27] : memref<1x25xf32, #tpu.memory_space<vmem>>, vector<1x25xf32>
    %40 = vector.broadcast %39 : vector<1x25xf32> to vector<128x25xf32>
    %41 = arith.addf %38, %40 : vector<128x25xf32>
    %cst_28 = arith.constant 0.000000e+00 : f32
    %42 = vector.broadcast %cst_28 : f32 to vector<128x25xf32>
    %43 = arith.maximumf %41, %42 : vector<128x25xf32>
    %44 = vector.extract_strided_slice %43 {offsets = [0, 0], sizes = [64, 25], strides = [1, 1]} : vector<128x25xf32> to vector<64x25xf32>
    %45 = vector.extract_strided_slice %33 {offsets = [0, 0], sizes = [64, 128], strides = [1, 1]} : vector<128x128xf32> to vector<64x128xf32>
    %cst_29 = arith.constant dense<0xFF800000> : vector<25xf32>
    %46 = vector.multi_reduction <maximumf>, %44, %cst_29 [0] : vector<64x25xf32> to vector<25xf32>
    %47 = vector.shape_cast %46 : vector<25xf32> to vector<1x25xf32>
    %c0_30 = arith.constant 0 : index
    %c0_31 = arith.constant 0 : index
    %48 = vector.load %arg11[%c0_30, %c0_31] : memref<25x5xf32, #tpu.memory_space<vmem>>, vector<25x5xf32>
    %cst_32 = arith.constant dense<0.000000e+00> : vector<1x5xf32>
    %49 = tpu.matmul %47, %48, %cst_32 {dimension_numbers = #tpu.dot_dimension_numbers<[1], [0], [0], [1], [0, 0, 1, 1], [], []>} : vector<1x25xf32>, vector<25x5xf32>, vector<1x5xf32> -> vector<1x5xf32>
    %50 = vector.shape_cast %49 : vector<1x5xf32> to vector<1x5xf32>
    %51 = vector.broadcast %50 : vector<1x5xf32> to vector<64x5xf32>
    %cst_33 = arith.constant 0.000000e+00 : f32
    %52 = vector.broadcast %cst_33 : f32 to vector<64x25xf32>
    %53 = vector.extract_strided_slice %51 {offsets = [0, 0], sizes = [64, 1], strides = [1, 1]} : vector<64x5xf32> to vector<64x1xf32>
    %c0_34 = arith.constant 0 : index
    %c0_35 = arith.constant 0 : index
    %c0_36 = arith.constant 0 : index
    %54 = vector.load %arg12[%c0_34, %c0_35, %c0_36] : memref<5x64x25xf32, #tpu.memory_space<vmem>>, vector<1x64x25xf32>
    %55 = vector.shape_cast %54 : vector<1x64x25xf32> to vector<64x25xf32>
    %56 = vector.broadcast %53 : vector<64x1xf32> to vector<64x25xf32>
    %57 = arith.mulf %56, %55 : vector<64x25xf32>
    %58 = arith.addf %52, %57 : vector<64x25xf32>
    %59 = vector.extract_strided_slice %51 {offsets = [0, 1], sizes = [64, 1], strides = [1, 1]} : vector<64x5xf32> to vector<64x1xf32>
    %c1 = arith.constant 1 : index
    %c0_37 = arith.constant 0 : index
    %c0_38 = arith.constant 0 : index
    %60 = vector.load %arg12[%c1, %c0_37, %c0_38] : memref<5x64x25xf32, #tpu.memory_space<vmem>>, vector<1x64x25xf32>
    %61 = vector.shape_cast %60 : vector<1x64x25xf32> to vector<64x25xf32>
    %62 = vector.broadcast %59 : vector<64x1xf32> to vector<64x25xf32>
    %63 = arith.mulf %62, %61 : vector<64x25xf32>
    %64 = arith.addf %58, %63 : vector<64x25xf32>
    %65 = vector.extract_strided_slice %51 {offsets = [0, 2], sizes = [64, 1], strides = [1, 1]} : vector<64x5xf32> to vector<64x1xf32>
    %c2 = arith.constant 2 : index
    %c0_39 = arith.constant 0 : index
    %c0_40 = arith.constant 0 : index
    %66 = vector.load %arg12[%c2, %c0_39, %c0_40] : memref<5x64x25xf32, #tpu.memory_space<vmem>>, vector<1x64x25xf32>
    %67 = vector.shape_cast %66 : vector<1x64x25xf32> to vector<64x25xf32>
    %68 = vector.broadcast %65 : vector<64x1xf32> to vector<64x25xf32>
    %69 = arith.mulf %68, %67 : vector<64x25xf32>
    %70 = arith.addf %64, %69 : vector<64x25xf32>
    %71 = vector.extract_strided_slice %51 {offsets = [0, 3], sizes = [64, 1], strides = [1, 1]} : vector<64x5xf32> to vector<64x1xf32>
    %c3 = arith.constant 3 : index
    %c0_41 = arith.constant 0 : index
    %c0_42 = arith.constant 0 : index
    %72 = vector.load %arg12[%c3, %c0_41, %c0_42] : memref<5x64x25xf32, #tpu.memory_space<vmem>>, vector<1x64x25xf32>
    %73 = vector.shape_cast %72 : vector<1x64x25xf32> to vector<64x25xf32>
    %74 = vector.broadcast %71 : vector<64x1xf32> to vector<64x25xf32>
    %75 = arith.mulf %74, %73 : vector<64x25xf32>
    %76 = arith.addf %70, %75 : vector<64x25xf32>
    %77 = vector.extract_strided_slice %51 {offsets = [0, 4], sizes = [64, 1], strides = [1, 1]} : vector<64x5xf32> to vector<64x1xf32>
    %c4 = arith.constant 4 : index
    %c0_43 = arith.constant 0 : index
    %c0_44 = arith.constant 0 : index
    %78 = vector.load %arg12[%c4, %c0_43, %c0_44] : memref<5x64x25xf32, #tpu.memory_space<vmem>>, vector<1x64x25xf32>
    %79 = vector.shape_cast %78 : vector<1x64x25xf32> to vector<64x25xf32>
    %80 = vector.broadcast %77 : vector<64x1xf32> to vector<64x25xf32>
    %81 = arith.mulf %80, %79 : vector<64x25xf32>
    %82 = arith.addf %76, %81 : vector<64x25xf32>
    %83 = arith.mulf %44, %82 : vector<64x25xf32>
    %cst_45 = arith.constant 0.000000e+00 : f32
    %84 = vector.broadcast %cst_45 : f32 to vector<1x64xf32>
    %c0_46 = arith.constant 0 : index
    %c0_47 = arith.constant 0 : index
    %c0_48 = arith.constant 0 : index
    %85 = vector.load %arg13[%c0_46, %c0_47, %c0_48] : memref<4x64x25xf32, #tpu.memory_space<vmem>>, vector<1x64x25xf32>
    %86 = vector.shape_cast %85 : vector<1x64x25xf32> to vector<64x25xf32>
    %87 = arith.mulf %83, %86 : vector<64x25xf32>
    %cst_49 = arith.constant dense<0.000000e+00> : vector<25xf32>
    %88 = vector.multi_reduction <add>, %87, %cst_49 [0] : vector<64x25xf32> to vector<25xf32>
    %89 = vector.shape_cast %88 : vector<25xf32> to vector<1x25xf32>
    %c0_50 = arith.constant 0 : index
    %c0_51 = arith.constant 0 : index
    %c0_52 = arith.constant 0 : index
    %90 = vector.load %arg14[%c0_50, %c0_51, %c0_52] : memref<4x25x64xf32, #tpu.memory_space<vmem>>, vector<1x25x64xf32>
    %91 = vector.shape_cast %90 : vector<1x25x64xf32> to vector<25x64xf32>
    %cst_53 = arith.constant dense<0.000000e+00> : vector<1x64xf32>
    %92 = tpu.matmul %89, %91, %cst_53 {dimension_numbers = #tpu.dot_dimension_numbers<[1], [0], [0], [1], [0, 0, 1, 1], [], []>} : vector<1x25xf32>, vector<25x64xf32>, vector<1x64xf32> -> vector<1x64xf32>
    %93 = arith.addf %84, %92 : vector<1x64xf32>
    %c1_54 = arith.constant 1 : index
    %c0_55 = arith.constant 0 : index
    %c0_56 = arith.constant 0 : index
    %94 = vector.load %arg13[%c1_54, %c0_55, %c0_56] : memref<4x64x25xf32, #tpu.memory_space<vmem>>, vector<1x64x25xf32>
    %95 = vector.shape_cast %94 : vector<1x64x25xf32> to vector<64x25xf32>
    %96 = arith.mulf %83, %95 : vector<64x25xf32>
    %cst_57 = arith.constant dense<0.000000e+00> : vector<25xf32>
    %97 = vector.multi_reduction <add>, %96, %cst_57 [0] : vector<64x25xf32> to vector<25xf32>
    %98 = vector.shape_cast %97 : vector<25xf32> to vector<1x25xf32>
    %c1_58 = arith.constant 1 : index
    %c0_59 = arith.constant 0 : index
    %c0_60 = arith.constant 0 : index
    %99 = vector.load %arg14[%c1_58, %c0_59, %c0_60] : memref<4x25x64xf32, #tpu.memory_space<vmem>>, vector<1x25x64xf32>
    %100 = vector.shape_cast %99 : vector<1x25x64xf32> to vector<25x64xf32>
    %cst_61 = arith.constant dense<0.000000e+00> : vector<1x64xf32>
    %101 = tpu.matmul %98, %100, %cst_61 {dimension_numbers = #tpu.dot_dimension_numbers<[1], [0], [0], [1], [0, 0, 1, 1], [], []>} : vector<1x25xf32>, vector<25x64xf32>, vector<1x64xf32> -> vector<1x64xf32>
    %102 = arith.addf %93, %101 : vector<1x64xf32>
    %c2_62 = arith.constant 2 : index
    %c0_63 = arith.constant 0 : index
    %c0_64 = arith.constant 0 : index
    %103 = vector.load %arg13[%c2_62, %c0_63, %c0_64] : memref<4x64x25xf32, #tpu.memory_space<vmem>>, vector<1x64x25xf32>
    %104 = vector.shape_cast %103 : vector<1x64x25xf32> to vector<64x25xf32>
    %105 = arith.mulf %83, %104 : vector<64x25xf32>
    %cst_65 = arith.constant dense<0.000000e+00> : vector<25xf32>
    %106 = vector.multi_reduction <add>, %105, %cst_65 [0] : vector<64x25xf32> to vector<25xf32>
    %107 = vector.shape_cast %106 : vector<25xf32> to vector<1x25xf32>
    %c2_66 = arith.constant 2 : index
    %c0_67 = arith.constant 0 : index
    %c0_68 = arith.constant 0 : index
    %108 = vector.load %arg14[%c2_66, %c0_67, %c0_68] : memref<4x25x64xf32, #tpu.memory_space<vmem>>, vector<1x25x64xf32>
    %109 = vector.shape_cast %108 : vector<1x25x64xf32> to vector<25x64xf32>
    %cst_69 = arith.constant dense<0.000000e+00> : vector<1x64xf32>
    %110 = tpu.matmul %107, %109, %cst_69 {dimension_numbers = #tpu.dot_dimension_numbers<[1], [0], [0], [1], [0, 0, 1, 1], [], []>} : vector<1x25xf32>, vector<25x64xf32>, vector<1x64xf32> -> vector<1x64xf32>
    %111 = arith.addf %102, %110 : vector<1x64xf32>
    %c3_70 = arith.constant 3 : index
    %c0_71 = arith.constant 0 : index
    %c0_72 = arith.constant 0 : index
    %112 = vector.load %arg13[%c3_70, %c0_71, %c0_72] : memref<4x64x25xf32, #tpu.memory_space<vmem>>, vector<1x64x25xf32>
    %113 = vector.shape_cast %112 : vector<1x64x25xf32> to vector<64x25xf32>
    %114 = arith.mulf %83, %113 : vector<64x25xf32>
    %cst_73 = arith.constant dense<0.000000e+00> : vector<25xf32>
    %115 = vector.multi_reduction <add>, %114, %cst_73 [0] : vector<64x25xf32> to vector<25xf32>
    %116 = vector.shape_cast %115 : vector<25xf32> to vector<1x25xf32>
    %c3_74 = arith.constant 3 : index
    %c0_75 = arith.constant 0 : index
    %c0_76 = arith.constant 0 : index
    %117 = vector.load %arg14[%c3_74, %c0_75, %c0_76] : memref<4x25x64xf32, #tpu.memory_space<vmem>>, vector<1x25x64xf32>
    %118 = vector.shape_cast %117 : vector<1x25x64xf32> to vector<25x64xf32>
    %cst_77 = arith.constant dense<0.000000e+00> : vector<1x64xf32>
    %119 = tpu.matmul %116, %118, %cst_77 {dimension_numbers = #tpu.dot_dimension_numbers<[1], [0], [0], [1], [0, 0, 1, 1], [], []>} : vector<1x25xf32>, vector<25x64xf32>, vector<1x64xf32> -> vector<1x64xf32>
    %120 = arith.addf %111, %119 : vector<1x64xf32>
    %cst_78 = arith.constant dense<0.000000e+00> : vector<1x128xf32>
    %121 = tpu.matmul %120, %45, %cst_78 {dimension_numbers = #tpu.dot_dimension_numbers<[1], [0], [0], [1], [0, 0, 1, 1], [], []>} : vector<1x64xf32>, vector<64x128xf32>, vector<1x128xf32> -> vector<1x128xf32>
    %122 = vector.extract_strided_slice %43 {offsets = [64, 0], sizes = [64, 25], strides = [1, 1]} : vector<128x25xf32> to vector<64x25xf32>
    %123 = vector.extract_strided_slice %33 {offsets = [64, 0], sizes = [64, 128], strides = [1, 1]} : vector<128x128xf32> to vector<64x128xf32>
    %cst_79 = arith.constant dense<0xFF800000> : vector<25xf32>
    %124 = vector.multi_reduction <maximumf>, %122, %cst_79 [0] : vector<64x25xf32> to vector<25xf32>
    %125 = vector.shape_cast %124 : vector<25xf32> to vector<1x25xf32>
    %c0_80 = arith.constant 0 : index
    %c0_81 = arith.constant 0 : index
    %126 = vector.load %arg11[%c0_80, %c0_81] : memref<25x5xf32, #tpu.memory_space<vmem>>, vector<25x5xf32>
    %cst_82 = arith.constant dense<0.000000e+00> : vector<1x5xf32>
    %127 = tpu.matmul %125, %126, %cst_82 {dimension_numbers = #tpu.dot_dimension_numbers<[1], [0], [0], [1], [0, 0, 1, 1], [], []>} : vector<1x25xf32>, vector<25x5xf32>, vector<1x5xf32> -> vector<1x5xf32>
    %128 = vector.shape_cast %127 : vector<1x5xf32> to vector<1x5xf32>
    %129 = vector.broadcast %128 : vector<1x5xf32> to vector<64x5xf32>
    %cst_83 = arith.constant 0.000000e+00 : f32
    %130 = vector.broadcast %cst_83 : f32 to vector<64x25xf32>
    %131 = vector.extract_strided_slice %129 {offsets = [0, 0], sizes = [64, 1], strides = [1, 1]} : vector<64x5xf32> to vector<64x1xf32>
    %c0_84 = arith.constant 0 : index
    %c0_85 = arith.constant 0 : index
    %c0_86 = arith.constant 0 : index
    %132 = vector.load %arg12[%c0_84, %c0_85, %c0_86] : memref<5x64x25xf32, #tpu.memory_space<vmem>>, vector<1x64x25xf32>
    %133 = vector.shape_cast %132 : vector<1x64x25xf32> to vector<64x25xf32>
    %134 = vector.broadcast %131 : vector<64x1xf32> to vector<64x25xf32>
    %135 = arith.mulf %134, %133 : vector<64x25xf32>
    %136 = arith.addf %130, %135 : vector<64x25xf32>
    %137 = vector.extract_strided_slice %129 {offsets = [0, 1], sizes = [64, 1], strides = [1, 1]} : vector<64x5xf32> to vector<64x1xf32>
    %c1_87 = arith.constant 1 : index
    %c0_88 = arith.constant 0 : index
    %c0_89 = arith.constant 0 : index
    %138 = vector.load %arg12[%c1_87, %c0_88, %c0_89] : memref<5x64x25xf32, #tpu.memory_space<vmem>>, vector<1x64x25xf32>
    %139 = vector.shape_cast %138 : vector<1x64x25xf32> to vector<64x25xf32>
    %140 = vector.broadcast %137 : vector<64x1xf32> to vector<64x25xf32>
    %141 = arith.mulf %140, %139 : vector<64x25xf32>
    %142 = arith.addf %136, %141 : vector<64x25xf32>
    %143 = vector.extract_strided_slice %129 {offsets = [0, 2], sizes = [64, 1], strides = [1, 1]} : vector<64x5xf32> to vector<64x1xf32>
    %c2_90 = arith.constant 2 : index
    %c0_91 = arith.constant 0 : index
    %c0_92 = arith.constant 0 : index
    %144 = vector.load %arg12[%c2_90, %c0_91, %c0_92] : memref<5x64x25xf32, #tpu.memory_space<vmem>>, vector<1x64x25xf32>
    %145 = vector.shape_cast %144 : vector<1x64x25xf32> to vector<64x25xf32>
    %146 = vector.broadcast %143 : vector<64x1xf32> to vector<64x25xf32>
    %147 = arith.mulf %146, %145 : vector<64x25xf32>
    %148 = arith.addf %142, %147 : vector<64x25xf32>
    %149 = vector.extract_strided_slice %129 {offsets = [0, 3], sizes = [64, 1], strides = [1, 1]} : vector<64x5xf32> to vector<64x1xf32>
    %c3_93 = arith.constant 3 : index
    %c0_94 = arith.constant 0 : index
    %c0_95 = arith.constant 0 : index
    %150 = vector.load %arg12[%c3_93, %c0_94, %c0_95] : memref<5x64x25xf32, #tpu.memory_space<vmem>>, vector<1x64x25xf32>
    %151 = vector.shape_cast %150 : vector<1x64x25xf32> to vector<64x25xf32>
    %152 = vector.broadcast %149 : vector<64x1xf32> to vector<64x25xf32>
    %153 = arith.mulf %152, %151 : vector<64x25xf32>
    %154 = arith.addf %148, %153 : vector<64x25xf32>
    %155 = vector.extract_strided_slice %129 {offsets = [0, 4], sizes = [64, 1], strides = [1, 1]} : vector<64x5xf32> to vector<64x1xf32>
    %c4_96 = arith.constant 4 : index
    %c0_97 = arith.constant 0 : index
    %c0_98 = arith.constant 0 : index
    %156 = vector.load %arg12[%c4_96, %c0_97, %c0_98] : memref<5x64x25xf32, #tpu.memory_space<vmem>>, vector<1x64x25xf32>
    %157 = vector.shape_cast %156 : vector<1x64x25xf32> to vector<64x25xf32>
    %158 = vector.broadcast %155 : vector<64x1xf32> to vector<64x25xf32>
    %159 = arith.mulf %158, %157 : vector<64x25xf32>
    %160 = arith.addf %154, %159 : vector<64x25xf32>
    %161 = arith.mulf %122, %160 : vector<64x25xf32>
    %cst_99 = arith.constant 0.000000e+00 : f32
    %162 = vector.broadcast %cst_99 : f32 to vector<1x64xf32>
    %c0_100 = arith.constant 0 : index
    %c0_101 = arith.constant 0 : index
    %c0_102 = arith.constant 0 : index
    %163 = vector.load %arg13[%c0_100, %c0_101, %c0_102] : memref<4x64x25xf32, #tpu.memory_space<vmem>>, vector<1x64x25xf32>
    %164 = vector.shape_cast %163 : vector<1x64x25xf32> to vector<64x25xf32>
    %165 = arith.mulf %161, %164 : vector<64x25xf32>
    %cst_103 = arith.constant dense<0.000000e+00> : vector<25xf32>
    %166 = vector.multi_reduction <add>, %165, %cst_103 [0] : vector<64x25xf32> to vector<25xf32>
    %167 = vector.shape_cast %166 : vector<25xf32> to vector<1x25xf32>
    %c0_104 = arith.constant 0 : index
    %c0_105 = arith.constant 0 : index
    %c0_106 = arith.constant 0 : index
    %168 = vector.load %arg14[%c0_104, %c0_105, %c0_106] : memref<4x25x64xf32, #tpu.memory_space<vmem>>, vector<1x25x64xf32>
    %169 = vector.shape_cast %168 : vector<1x25x64xf32> to vector<25x64xf32>
    %cst_107 = arith.constant dense<0.000000e+00> : vector<1x64xf32>
    %170 = tpu.matmul %167, %169, %cst_107 {dimension_numbers = #tpu.dot_dimension_numbers<[1], [0], [0], [1], [0, 0, 1, 1], [], []>} : vector<1x25xf32>, vector<25x64xf32>, vector<1x64xf32> -> vector<1x64xf32>
    %171 = arith.addf %162, %170 : vector<1x64xf32>
    %c1_108 = arith.constant 1 : index
    %c0_109 = arith.constant 0 : index
    %c0_110 = arith.constant 0 : index
    %172 = vector.load %arg13[%c1_108, %c0_109, %c0_110] : memref<4x64x25xf32, #tpu.memory_space<vmem>>, vector<1x64x25xf32>
    %173 = vector.shape_cast %172 : vector<1x64x25xf32> to vector<64x25xf32>
    %174 = arith.mulf %161, %173 : vector<64x25xf32>
    %cst_111 = arith.constant dense<0.000000e+00> : vector<25xf32>
    %175 = vector.multi_reduction <add>, %174, %cst_111 [0] : vector<64x25xf32> to vector<25xf32>
    %176 = vector.shape_cast %175 : vector<25xf32> to vector<1x25xf32>
    %c1_112 = arith.constant 1 : index
    %c0_113 = arith.constant 0 : index
    %c0_114 = arith.constant 0 : index
    %177 = vector.load %arg14[%c1_112, %c0_113, %c0_114] : memref<4x25x64xf32, #tpu.memory_space<vmem>>, vector<1x25x64xf32>
    %178 = vector.shape_cast %177 : vector<1x25x64xf32> to vector<25x64xf32>
    %cst_115 = arith.constant dense<0.000000e+00> : vector<1x64xf32>
    %179 = tpu.matmul %176, %178, %cst_115 {dimension_numbers = #tpu.dot_dimension_numbers<[1], [0], [0], [1], [0, 0, 1, 1], [], []>} : vector<1x25xf32>, vector<25x64xf32>, vector<1x64xf32> -> vector<1x64xf32>
    %180 = arith.addf %171, %179 : vector<1x64xf32>
    %c2_116 = arith.constant 2 : index
    %c0_117 = arith.constant 0 : index
    %c0_118 = arith.constant 0 : index
    %181 = vector.load %arg13[%c2_116, %c0_117, %c0_118] : memref<4x64x25xf32, #tpu.memory_space<vmem>>, vector<1x64x25xf32>
    %182 = vector.shape_cast %181 : vector<1x64x25xf32> to vector<64x25xf32>
    %183 = arith.mulf %161, %182 : vector<64x25xf32>
    %cst_119 = arith.constant dense<0.000000e+00> : vector<25xf32>
    %184 = vector.multi_reduction <add>, %183, %cst_119 [0] : vector<64x25xf32> to vector<25xf32>
    %185 = vector.shape_cast %184 : vector<25xf32> to vector<1x25xf32>
    %c2_120 = arith.constant 2 : index
    %c0_121 = arith.constant 0 : index
    %c0_122 = arith.constant 0 : index
    %186 = vector.load %arg14[%c2_120, %c0_121, %c0_122] : memref<4x25x64xf32, #tpu.memory_space<vmem>>, vector<1x25x64xf32>
    %187 = vector.shape_cast %186 : vector<1x25x64xf32> to vector<25x64xf32>
    %cst_123 = arith.constant dense<0.000000e+00> : vector<1x64xf32>
    %188 = tpu.matmul %185, %187, %cst_123 {dimension_numbers = #tpu.dot_dimension_numbers<[1], [0], [0], [1], [0, 0, 1, 1], [], []>} : vector<1x25xf32>, vector<25x64xf32>, vector<1x64xf32> -> vector<1x64xf32>
    %189 = arith.addf %180, %188 : vector<1x64xf32>
    %c3_124 = arith.constant 3 : index
    %c0_125 = arith.constant 0 : index
    %c0_126 = arith.constant 0 : index
    %190 = vector.load %arg13[%c3_124, %c0_125, %c0_126] : memref<4x64x25xf32, #tpu.memory_space<vmem>>, vector<1x64x25xf32>
    %191 = vector.shape_cast %190 : vector<1x64x25xf32> to vector<64x25xf32>
    %192 = arith.mulf %161, %191 : vector<64x25xf32>
    %cst_127 = arith.constant dense<0.000000e+00> : vector<25xf32>
    %193 = vector.multi_reduction <add>, %192, %cst_127 [0] : vector<64x25xf32> to vector<25xf32>
    %194 = vector.shape_cast %193 : vector<25xf32> to vector<1x25xf32>
    %c3_128 = arith.constant 3 : index
    %c0_129 = arith.constant 0 : index
    %c0_130 = arith.constant 0 : index
    %195 = vector.load %arg14[%c3_128, %c0_129, %c0_130] : memref<4x25x64xf32, #tpu.memory_space<vmem>>, vector<1x25x64xf32>
    %196 = vector.shape_cast %195 : vector<1x25x64xf32> to vector<25x64xf32>
    %cst_131 = arith.constant dense<0.000000e+00> : vector<1x64xf32>
    %197 = tpu.matmul %194, %196, %cst_131 {dimension_numbers = #tpu.dot_dimension_numbers<[1], [0], [0], [1], [0, 0, 1, 1], [], []>} : vector<1x25xf32>, vector<25x64xf32>, vector<1x64xf32> -> vector<1x64xf32>
    %198 = arith.addf %189, %197 : vector<1x64xf32>
    %cst_132 = arith.constant dense<0.000000e+00> : vector<1x128xf32>
    %199 = tpu.matmul %198, %123, %cst_132 {dimension_numbers = #tpu.dot_dimension_numbers<[1], [0], [0], [1], [0, 0, 1, 1], [], []>} : vector<1x64xf32>, vector<64x128xf32>, vector<1x128xf32> -> vector<1x128xf32>
    %200 = tpu.concatenate %121, %199 in 0 : vector<1x128xf32>, vector<1x128xf32> -> vector<2x128xf32>
    %cst_133 = arith.constant 6.250000e-04 : f32
    %201 = vector.broadcast %cst_133 : f32 to vector<2x128xf32>
    %202 = arith.mulf %200, %201 : vector<2x128xf32>
    %c0_134 = arith.constant 0 : index
    %c0_135 = arith.constant 0 : index
    %203 = vector.load %arg15[%c0_134, %c0_135] : memref<128x128xf32, #tpu.memory_space<vmem>>, vector<128x128xf32>
    %cst_136 = arith.constant dense<0.000000e+00> : vector<2x128xf32>
    %204 = tpu.matmul %202, %203, %cst_136 {dimension_numbers = #tpu.dot_dimension_numbers<[1], [0], [0], [1], [0, 0, 1, 1], [], []>} : vector<2x128xf32>, vector<128x128xf32>, vector<2x128xf32> -> vector<2x128xf32>
    %c0_137 = arith.constant 0 : index
    %c0_138 = arith.constant 0 : index
    %205 = vector.load %arg16[%c0_137, %c0_138] : memref<1x128xf32, #tpu.memory_space<vmem>>, vector<1x128xf32>
    %206 = vector.broadcast %205 : vector<1x128xf32> to vector<2x128xf32>
    %207 = arith.addf %204, %206 : vector<2x128xf32>
    %c0_139 = arith.constant 0 : index
    %c0_140 = arith.constant 0 : index
    %208 = vector.load %arg18[%c0_139, %c0_140] : memref<1x128xf32, #tpu.memory_space<vmem>>, vector<1x128xf32>
    %209 = vector.broadcast %208 : vector<1x128xf32> to vector<2x128xf32>
    %210 = arith.mulf %207, %209 : vector<2x128xf32>
    %cst_141 = arith.constant 1.000000e+00 : f32
    %211 = vector.broadcast %cst_141 : f32 to vector<1x128xf32>
    %212 = arith.subf %211, %208 : vector<1x128xf32>
    %cst_142 = arith.constant 1.000000e+30 : f32
    %213 = vector.broadcast %cst_142 : f32 to vector<1x128xf32>
    %214 = arith.mulf %213, %212 : vector<1x128xf32>
    %215 = vector.broadcast %214 : vector<1x128xf32> to vector<2x128xf32>
    %216 = arith.subf %210, %215 : vector<2x128xf32>
    %cst_143 = arith.constant dense<0xFF800000> : vector<2xf32>
    %217 = vector.multi_reduction <maximumf>, %216, %cst_143 [1] : vector<2x128xf32> to vector<2xf32>
    %218 = vector.shape_cast %217 : vector<2xf32> to vector<2x1xf32>
    %219 = vector.broadcast %218 : vector<2x1xf32> to vector<2x128xf32>
    %220 = arith.subf %216, %219 : vector<2x128xf32>
    %221 = math.exp %220 : vector<2x128xf32>
    %222 = vector.broadcast %208 : vector<1x128xf32> to vector<2x128xf32>
    %223 = arith.mulf %221, %222 : vector<2x128xf32>
    %c0_144 = arith.constant 0 : index
    %c0_145 = arith.constant 0 : index
    %224 = vector.load %arg17[%c0_144, %c0_145] : memref<128x128xf32, #tpu.memory_space<vmem>>, vector<128x128xf32>
    %cst_146 = arith.constant dense<0.000000e+00> : vector<2x128xf32>
    %225 = tpu.matmul %223, %224, %cst_146 {dimension_numbers = #tpu.dot_dimension_numbers<[1], [0], [0], [1], [0, 0, 1, 1], [], []>} : vector<2x128xf32>, vector<128x128xf32>, vector<2x128xf32> -> vector<2x128xf32>
    %cst_147 = arith.constant 1.000000e+00 : f32
    %226 = vector.broadcast %cst_147 : f32 to vector<1x128xf32>
    %227 = arith.subf %226, %208 : vector<1x128xf32>
    %228 = vector.broadcast %227 : vector<1x128xf32> to vector<2x128xf32>
    %229 = arith.addf %225, %228 : vector<2x128xf32>
    %230 = arith.divf %223, %229 : vector<2x128xf32>
    %c0_148 = arith.constant 0 : index
    %c0_149 = arith.constant 0 : index
    %231 = vector.load %arg19[%c0_148, %c0_149] : memref<2x128xf32, #tpu.memory_space<vmem>>, vector<2x128xf32>
    tpu.vector_store %arg19[%c0_148, %c0_149], %230 {strides = array<i32>} : memref<2x128xf32, #tpu.memory_space<vmem>>, vector<2x128xf32>,
    return
  }
  func.func @transform_0(%arg0: i32) -> (i32, i32) {
    %c0_i32 = arith.constant 0 : i32
    %c0_i32_0 = arith.constant 0 : i32
    %c0_i32_1 = arith.constant 0 : i32
    return %c0_i32, %c0_i32_0 : i32, i32
  }
  func.func @transform_1(%arg0: i32) -> (i32, i32) {
    %c0_i32 = arith.constant 0 : i32
    %c0_i32_0 = arith.constant 0 : i32
    %c0_i32_1 = arith.constant 0 : i32
    return %c0_i32, %c0_i32_0 : i32, i32
  }
  func.func @transform_2(%arg0: i32) -> (i32, i32) {
    %c0_i32 = arith.constant 0 : i32
    %c0_i32_0 = arith.constant 0 : i32
    %c0_i32_1 = arith.constant 0 : i32
    return %c0_i32, %c0_i32_0 : i32, i32
  }
  func.func @transform_3(%arg0: i32) -> (i32, i32) {
    %c0_i32 = arith.constant 0 : i32
    %c0_i32_0 = arith.constant 0 : i32
    %c0_i32_1 = arith.constant 0 : i32
    return %c0_i32, %c0_i32_0 : i32, i32
  }
  func.func @transform_4(%arg0: i32) -> (i32, i32) {
    %c0_i32 = arith.constant 0 : i32
    %c0_i32_0 = arith.constant 0 : i32
    %c0_i32_1 = arith.constant 0 : i32
    return %c0_i32, %c0_i32_0 : i32, i32
  }
  func.func @transform_5(%arg0: i32) -> (i32, i32) {
    %c0_i32 = arith.constant 0 : i32
    %c0_i32_0 = arith.constant 0 : i32
    %c0_i32_1 = arith.constant 0 : i32
    return %c0_i32, %c0_i32_0 : i32, i32
  }
  func.func @transform_6(%arg0: i32) -> (i32, i32) {
    %c0_i32 = arith.constant 0 : i32
    %c0_i32_0 = arith.constant 0 : i32
    %c0_i32_1 = arith.constant 0 : i32
    return %c0_i32, %c0_i32_0 : i32, i32
  }
  func.func @transform_7(%arg0: i32) -> (i32, i32) {
    %c0_i32 = arith.constant 0 : i32
    %c0_i32_0 = arith.constant 0 : i32
    %c0_i32_1 = arith.constant 0 : i32
    return %c0_i32, %c0_i32_0 : i32, i32
  }
  func.func @transform_8(%arg0: i32) -> (i32, i32) {
    %c0_i32 = arith.constant 0 : i32
    %c0_i32_0 = arith.constant 0 : i32
    %c0_i32_1 = arith.constant 0 : i32
    return %c0_i32, %c0_i32_0 : i32, i32
  }
  func.func @transform_9(%arg0: i32) -> (i32, i32) {
    %c0_i32 = arith.constant 0 : i32
    %c0_i32_0 = arith.constant 0 : i32
    %c0_i32_1 = arith.constant 0 : i32
    return %c0_i32, %c0_i32_0 : i32, i32
  }
  func.func @transform_10(%arg0: i32) -> (i32, i32) {
    %c0_i32 = arith.constant 0 : i32
    %c0_i32_0 = arith.constant 0 : i32
    %c0_i32_1 = arith.constant 0 : i32
    return %c0_i32, %c0_i32_0 : i32, i32
  }
  func.func @transform_11(%arg0: i32) -> (i32, i32, i32) {
    %c0_i32 = arith.constant 0 : i32
    %c0_i32_0 = arith.constant 0 : i32
    %c0_i32_1 = arith.constant 0 : i32
    %c0_i32_2 = arith.constant 0 : i32
    return %c0_i32, %c0_i32_0, %c0_i32_1 : i32, i32, i32
  }
  func.func @transform_12(%arg0: i32) -> (i32, i32, i32) {
    %c0_i32 = arith.constant 0 : i32
    %c0_i32_0 = arith.constant 0 : i32
    %c0_i32_1 = arith.constant 0 : i32
    %c0_i32_2 = arith.constant 0 : i32
    return %c0_i32, %c0_i32_0, %c0_i32_1 : i32, i32, i32
  }
  func.func @transform_13(%arg0: i32) -> (i32, i32, i32) {
    %c0_i32 = arith.constant 0 : i32
    %c0_i32_0 = arith.constant 0 : i32
    %c0_i32_1 = arith.constant 0 : i32
    %c0_i32_2 = arith.constant 0 : i32
    return %c0_i32, %c0_i32_0, %c0_i32_1 : i32, i32, i32
  }
  func.func @transform_14(%arg0: i32) -> (i32, i32) {
    %c0_i32 = arith.constant 0 : i32
    %c0_i32_0 = arith.constant 0 : i32
    %c0_i32_1 = arith.constant 0 : i32
    return %c0_i32, %c0_i32_0 : i32, i32
  }
  func.func @transform_15(%arg0: i32) -> (i32, i32) {
    %c0_i32 = arith.constant 0 : i32
    %c0_i32_0 = arith.constant 0 : i32
    %c0_i32_1 = arith.constant 0 : i32
    return %c0_i32, %c0_i32_0 : i32, i32
  }
  func.func @transform_16(%arg0: i32) -> (i32, i32) {
    %c0_i32 = arith.constant 0 : i32
    %c0_i32_0 = arith.constant 0 : i32
    %c0_i32_1 = arith.constant 0 : i32
    return %c0_i32, %c0_i32_0 : i32, i32
  }
  func.func @transform_17(%arg0: i32) -> (i32, i32) {
    %c0_i32 = arith.constant 0 : i32
    %c0_i32_0 = arith.constant 0 : i32
    %c0_i32_1 = arith.constant 0 : i32
    return %c0_i32, %c0_i32_0 : i32, i32
  }
  func.func @transform_18(%arg0: i32) -> (i32, i32) {
    %c0_i32 = arith.constant 0 : i32
    %c0_i32_0 = arith.constant 0 : i32
    %c0_i32_1 = arith.constant 0 : i32
    return %c0_i32, %c0_i32_0 : i32, i32
  }
}

</mosaic_0001>

<llo_original>
// kernel: cabnetpp_forward.1
$region0: #{cabnetpp_forward.1}
  #allocation0 [shape = 'u32[]', space=smem, size = 0x4, offset = 0x4, fixed_abs, tag = 'smem constant byte address 0x4 - core index']
  #allocation1 [shape = 'u32[72,128]{1,0:T(1,128)}', space=vmem, size = 0x9000, scoped, tag = 'internal scratch']
  %s0 = inlined_call_operand.vmem [shape: f32[128,128], index: 0, kind: input, shape index: {}]
  %s1 = inlined_call_operand.vmem [shape: f32[2,128], index: 1, kind: input, shape index: {}]
  %s2 = inlined_call_operand.hbm [shape: f32[128,2], index: 2, kind: input, shape index: {}]
  %s3 = inlined_call_operand.hbm [shape: f32[128,128], index: 3, kind: input, shape index: {}]
  %s4 = inlined_call_operand.vmem [shape: f32[1,128], index: 4, kind: input, shape index: {}]
  %s5 = inlined_call_operand.hbm [shape: f32[128,128], index: 5, kind: input, shape index: {}]
  %s6 = inlined_call_operand.vmem [shape: f32[1,128], index: 6, kind: input, shape index: {}]
  %s7 = inlined_call_operand.vmem [shape: f32[128,25], index: 7, kind: input, shape index: {}]
  %s8 = inlined_call_operand.vmem [shape: f32[1,25], index: 8, kind: input, shape index: {}]
  %s9 = inlined_call_operand.vmem [shape: f32[1,25], index: 9, kind: input, shape index: {}]
  %s10 = inlined_call_operand.vmem [shape: f32[25,5], index: 10, kind: input, shape index: {}]
  %s11 = inlined_call_operand.hbm [shape: f32[5,64,25], index: 11, kind: input, shape index: {}]
  %s12 = inlined_call_operand.hbm [shape: f32[4,64,25], index: 12, kind: input, shape index: {}]
  %s13 = inlined_call_operand.hbm [shape: f32[4,25,64], index: 13, kind: input, shape index: {}]
  %s14 = inlined_call_operand.hbm [shape: f32[128,128], index: 14, kind: input, shape index: {}]
  %s15 = inlined_call_operand.vmem [shape: f32[1,128], index: 15, kind: input, shape index: {}]
  %s16 = inlined_call_operand.hbm [shape: f32[128,128], index: 16, kind: input, shape index: {}]
  %s17 = inlined_call_operand.vmem [shape: f32[1,128], index: 17, kind: input, shape index: {}]
  %s18 = inlined_call_operand.vmem [shape: f32[2,128], index: 18, kind: output, shape index: {}]
  %s19 = sld [smem:[#allocation0]]
  $region114: #{cabnetpp_forward.1} parent=0
    _
  %s21 = ssub.s32 1, %s19
  %s22 = scalar_select 0, %s21, %s19
  $region1: #{cabnetpp_forward.1} parent=0
    #allocation2 [shape = 'u8[65536]{0}', space=vmem, size = 0x10000, scoped, tag = 'input window, operand 2, single buffered']
    #allocation3 [shape = 's32[1]{0}', space=sflag, size = 0x4, scoped, tag = 'scoped memory for cabnetpp_forward.1']
    #allocation4 [shape = 'u8[65536]{0}', space=vmem, size = 0x10000, scoped, tag = 'input window, operand 3, single buffered']
    #allocation5 [shape = 's32[1]{0}', space=sflag, size = 0x4, scoped, tag = 'scoped memory for cabnetpp_forward.1']
    #allocation6 [shape = 'u8[65536]{0}', space=vmem, size = 0x10000, scoped, tag = 'input window, operand 5, single buffered']
    #allocation7 [shape = 'u8[163840]{0}', space=vmem, size = 0x28000, scoped, tag = 'input window, operand 11, single buffered']
    #allocation8 [shape = 's32[1]{0}', space=sflag, size = 0x4, scoped, tag = 'scoped memory for cabnetpp_forward.1']
    #allocation9 [shape = 'u8[131072]{0}', space=vmem, size = 0x20000, scoped, tag = 'input window, operand 12, single buffered']
    #allocation10 [shape = 'u8[65536]{0}', space=vmem, size = 0x10000, scoped, tag = 'input window, operand 13, single buffered']
    #allocation11 [shape = 's32[1]{0}', space=sflag, size = 0x4, scoped, tag = 'scoped memory for cabnetpp_forward.1']
    #allocation12 [shape = 'u8[65536]{0}', space=vmem, size = 0x10000, scoped, tag = 'input window, operand 14, single buffered']
    #allocation13 [shape = 'u8[65536]{0}', space=vmem, size = 0x10000, scoped, tag = 'input window, operand 16, single buffered']
    #allocation14 [shape = 's32[1]{0}', space=sflag, size = 0x4, scoped, tag = 'scoped memory for cabnetpp_forward.1']
    %23 = vsyncpa [#allocation3], 0
    %24 = vsyncpa [#allocation5], 0
    %25 = vsyncpa [#allocation8], 0
    %26 = vsyncpa [#allocation11], 0
    %27 = vsyncpa [#allocation14], 0
    // Predicated region
    $region2: #{cabnetpp_forward.1} parent=1 // pred_check
      _
    $region3: #{cabnetpp_forward.1} parent=1 // pred_check_branch
      %29 = sbr.rel (0) target = $region5
    $region4: #{cabnetpp_forward.1} parent=1 // pred_region
      _
    $region5: #{cabnetpp_forward.1} parent=1 // pred_fallthru
      _
    // Predicated region
    $region6: #{cabnetpp_forward.1} parent=1 // pred_check
      _
    $region7: #{cabnetpp_forward.1} parent=1 // pred_check_branch
      %31 = sbr.rel (0) target = $region9
    $region8: #{cabnetpp_forward.1} parent=1 // pred_region
      _
    $region9: #{cabnetpp_forward.1} parent=1 // pred_fallthru
      _
    // Predicated region
    $region10: #{cabnetpp_forward.1} parent=1 // pred_check
      _
    $region11: #{cabnetpp_forward.1} parent=1 // pred_check_branch
      %33 = sbr.rel (0) target = $region13
    $region12: #{cabnetpp_forward.1} parent=1 // pred_region
      %35 = vsyncadd [#allocation3], 0
      %s36 = sshll.u32 %s2, 4
      %s37 = int_to_ptr.hbm [resolvable:$true] %s36
      %s38 = sshll.u32 [#allocation2], 4
      %s39 = int_to_ptr.vmem [resolvable:$true] %s38
      %44 = dma.hbm_to_vmem [thread:$0]  %s37, 2048, %s39, [#allocation3], 128, 128, 8
    $region13: #{cabnetpp_forward.1} parent=1 // pred_fallthru
      _
    // Predicated region
    $region14: #{cabnetpp_forward.1} parent=1 // pred_check
      _
    $region15: #{cabnetpp_forward.1} parent=1 // pred_check_branch
      %46 = sbr.rel (0) target = $region17
    $region16: #{cabnetpp_forward.1} parent=1 // pred_region
      %48 = vsyncadd [#allocation5], 0
      %s49 = sshll.u32 %s3, 4
      %s50 = int_to_ptr.hbm [resolvable:$true] %s49
      %s51 = sshll.u32 [#allocation4], 4
      %s52 = int_to_ptr.vmem [resolvable:$true] %s51
      %57 = dma.hbm_to_vmem [thread:$0]  %s50, 2048, %s52, [#allocation5], 128, 128, 8
    $region17: #{cabnetpp_forward.1} parent=1 // pred_fallthru
      _
    // Predicated region
    $region18: #{cabnetpp_forward.1} parent=1 // pred_check
      _
    $region19: #{cabnetpp_forward.1} parent=1 // pred_check_branch
      %59 = sbr.rel (0) target = $region21
    $region20: #{cabnetpp_forward.1} parent=1 // pred_region
      _
    $region21: #{cabnetpp_forward.1} parent=1 // pred_fallthru
      _
    // Predicated region
    $region22: #{cabnetpp_forward.1} parent=1 // pred_check
      _
    $region23: #{cabnetpp_forward.1} parent=1 // pred_check_branch
      %61 = sbr.rel (0) target = $region25
    $region24: #{cabnetpp_forward.1} parent=1 // pred_region
      %63 = vsyncadd [#allocation5], 0
      %s64 = sshll.u32 %s5, 4
      %s65 = int_to_ptr.hbm [resolvable:$true] %s64
      %s66 = sshll.u32 [#allocation6], 4
      %s67 = int_to_ptr.vmem [resolvable:$true] %s66
      %72 = dma.hbm_to_vmem [thread:$0]  %s65, 2048, %s67, [#allocation5], 128, 128, 8
    $region25: #{cabnetpp_forward.1} parent=1 // pred_fallthru
      _
    // Predicated region
    $region26: #{cabnetpp_forward.1} parent=1 // pred_check
      _
    $region27: #{cabnetpp_forward.1} parent=1 // pred_check_branch
      %74 = sbr.rel (0) target = $region29
    $region28: #{cabnetpp_forward.1} parent=1 // pred_region
      _
    $region29: #{cabnetpp_forward.1} parent=1 // pred_fallthru
      _
    // Predicated region
    $region30: #{cabnetpp_forward.1} parent=1 // pred_check
      _
    $region31: #{cabnetpp_forward.1} parent=1 // pred_check_branch
      %76 = sbr.rel (0) target = $region33
    $region32: #{cabnetpp_forward.1} parent=1 // pred_region
      _
    $region33: #{cabnetpp_forward.1} parent=1 // pred_fallthru
      _
    // Predicated region
    $region34: #{cabnetpp_forward.1} parent=1 // pred_check
      _
    $region35: #{cabnetpp_forward.1} parent=1 // pred_check_branch
      %78 = sbr.rel (0) target = $region37
    $region36: #{cabnetpp_forward.1} parent=1 // pred_region
      _
    $region37: #{cabnetpp_forward.1} parent=1 // pred_fallthru
      _
    // Predicated region
    $region38: #{cabnetpp_forward.1} parent=1 // pred_check
      _
    $region39: #{cabnetpp_forward.1} parent=1 // pred_check_branch
      %80 = sbr.rel (0) target = $region41
    $region40: #{cabnetpp_forward.1} parent=1 // pred_region
      _
    $region41: #{cabnetpp_forward.1} parent=1 // pred_fallthru
      _
    // Predicated region
    $region42: #{cabnetpp_forward.1} parent=1 // pred_check
      _
    $region43: #{cabnetpp_forward.1} parent=1 // pred_check_branch
      %82 = sbr.rel (0) target = $region45
    $region44: #{cabnetpp_forward.1} parent=1 // pred_region
      _
    $region45: #{cabnetpp_forward.1} parent=1 // pred_fallthru
      _
    // Predicated region
    $region46: #{cabnetpp_forward.1} parent=1 // pred_check
      _
    $region47: #{cabnetpp_forward.1} parent=1 // pred_check_branch
      %84 = sbr.rel (0) target = $region49
    $region48: #{cabnetpp_forward.1} parent=1 // pred_region
      %86 = vsyncadd [#allocation8], 0
      %s87 = sshll.u32 %s11, 4
      %s88 = int_to_ptr.hbm [resolvable:$true] %s87
      %s89 = sshll.u32 [#allocation7], 4
      %s90 = int_to_ptr.vmem [resolvable:$true] %s89
      %95 = dma.hbm_to_vmem [thread:$0]  %s88, 5120, %s90, [#allocation8], 128, 128, 8
    $region49: #{cabnetpp_forward.1} parent=1 // pred_fallthru
      _
    // Predicated region
    $region50: #{cabnetpp_forward.1} parent=1 // pred_check
      _
    $region51: #{cabnetpp_forward.1} parent=1 // pred_check_branch
      %97 = sbr.rel (0) target = $region53
    $region52: #{cabnetpp_forward.1} parent=1 // pred_region
      %99 = vsyncadd [#allocation8], 0
      %s100 = sshll.u32 %s12, 4
      %s101 = int_to_ptr.hbm [resolvable:$true] %s100
      %s102 = sshll.u32 [#allocation9], 4
      %s103 = int_to_ptr.vmem [resolvable:$true] %s102
      %108 = dma.hbm_to_vmem [thread:$0]  %s101, 4096, %s103, [#allocation8], 128, 128, 8
    $region53: #{cabnetpp_forward.1} parent=1 // pred_fallthru
      _
    // Predicated region
    $region54: #{cabnetpp_forward.1} parent=1 // pred_check
      _
    $region55: #{cabnetpp_forward.1} parent=1 // pred_check_branch
      %110 = sbr.rel (0) target = $region57
    $region56: #{cabnetpp_forward.1} parent=1 // pred_region
      %112 = vsyncadd [#allocation11], 0
      %s113 = sshll.u32 %s13, 4
      %s114 = int_to_ptr.hbm [resolvable:$true] %s113
      %s115 = sshll.u32 [#allocation10], 4
      %s116 = int_to_ptr.vmem [resolvable:$true] %s115
      %121 = dma.hbm_to_vmem [thread:$0]  %s114, 2048, %s116, [#allocation11], 128, 128, 8
    $region57: #{cabnetpp_forward.1} parent=1 // pred_fallthru
      _
    // Predicated region
    $region58: #{cabnetpp_forward.1} parent=1 // pred_check
      _
    $region59: #{cabnetpp_forward.1} parent=1 // pred_check_branch
      %123 = sbr.rel (0) target = $region61
    $region60: #{cabnetpp_forward.1} parent=1 // pred_region
      %125 = vsyncadd [#allocation11], 0
      %s126 = sshll.u32 %s14, 4
      %s127 = int_to_ptr.hbm [resolvable:$true] %s126
      %s128 = sshll.u32 [#allocation12], 4
      %s129 = int_to_ptr.vmem [resolvable:$true] %s128
      %134 = dma.hbm_to_vmem [thread:$0]  %s127, 2048, %s129, [#allocation11], 128, 128, 8
    $region61: #{cabnetpp_forward.1} parent=1 // pred_fallthru
      _
    // Predicated region
    $region62: #{cabnetpp_forward.1} parent=1 // pred_check
      _
    $region63: #{cabnetpp_forward.1} parent=1 // pred_check_branch
      %136 = sbr.rel (0) target = $region65
    $region64: #{cabnetpp_forward.1} parent=1 // pred_region
      _
    $region65: #{cabnetpp_forward.1} parent=1 // pred_fallthru
      _
    // Predicated region
    $region66: #{cabnetpp_forward.1} parent=1 // pred_check
      _
    $region67: #{cabnetpp_forward.1} parent=1 // pred_check_branch
      %138 = sbr.rel (0) target = $region69
    $region68: #{cabnetpp_forward.1} parent=1 // pred_region
      %140 = vsyncadd [#allocation14], 0
      %s141 = sshll.u32 %s16, 4
      %s142 = int_to_ptr.hbm [resolvable:$true] %s141
      %s143 = sshll.u32 [#allocation13], 4
      %s144 = int_to_ptr.vmem [resolvable:$true] %s143
      %149 = dma.hbm_to_vmem [thread:$0]  %s142, 2048, %s144, [#allocation14], 128, 128, 8
    $region69: #{cabnetpp_forward.1} parent=1 // pred_fallthru
      _
    // Predicated region
    $region70: #{cabnetpp_forward.1} parent=1 // pred_check
      _
    $region71: #{cabnetpp_forward.1} parent=1 // pred_check_branch
      %151 = sbr.rel (0) target = $region73
    $region72: #{cabnetpp_forward.1} parent=1 // pred_region
      _
    $region73: #{cabnetpp_forward.1} parent=1 // pred_fallthru
      _
    // Predicated region
    $region74: #{cabnetpp_forward.1} parent=1 // pred_check
      _
    $region75: #{cabnetpp_forward.1} parent=1 // pred_check_branch
      %153 = sbr.rel (0) target = $region77
    $region76: #{cabnetpp_forward.1} parent=1 // pred_region
      %155 = dma.done [#allocation3], 2048
    $region77: #{cabnetpp_forward.1} parent=1 // pred_fallthru
      _
    // Predicated region
    $region78: #{cabnetpp_forward.1} parent=1 // pred_check
      _
    $region79: #{cabnetpp_forward.1} parent=1 // pred_check_branch
      %157 = sbr.rel (0) target = $region81
    $region80: #{cabnetpp_forward.1} parent=1 // pred_region
      %159 = dma.done [#allocation5], 2048
    $region81: #{cabnetpp_forward.1} parent=1 // pred_fallthru
      _
    // Predicated region
    $region82: #{cabnetpp_forward.1} parent=1 // pred_check
      _
    $region83: #{cabnetpp_forward.1} parent=1 // pred_check_branch
      %161 = sbr.rel (0) target = $region85
    $region84: #{cabnetpp_forward.1} parent=1 // pred_region
      %163 = dma.done [#allocation5], 2048
    $region85: #{cabnetpp_forward.1} parent=1 // pred_fallthru
      _
    // Predicated region
    $region86: #{cabnetpp_forward.1} parent=1 // pred_check
      _
    $region87: #{cabnetpp_forward.1} parent=1 // pred_check_branch
      %165 = sbr.rel (0) target = $region89
    $region88: #{cabnetpp_forward.1} parent=1 // pred_region
      %167 = dma.done [#allocation8], 5120
    $region89: #{cabnetpp_forward.1} parent=1 // pred_fallthru
      _
    // Predicated region
    $region90: #{cabnetpp_forward.1} parent=1 // pred_check
      _
    $region91: #{cabnetpp_forward.1} parent=1 // pred_check_branch
      %169 = sbr.rel (0) target = $region93
    $region92: #{cabnetpp_forward.1} parent=1 // pred_region
      %171 = dma.done [#allocation8], 4096
    $region93: #{cabnetpp_forward.1} parent=1 // pred_fallthru
      _
    // Predicated region
    $region94: #{cabnetpp_forward.1} parent=1 // pred_check
      _
    $region95: #{cabnetpp_forward.1} parent=1 // pred_check_branch
      %173 = sbr.rel (0) target = $region97
    $region96: #{cabnetpp_forward.1} parent=1 // pred_region
      %175 = dma.done [#allocation11], 2048
    $region97: #{cabnetpp_forward.1} parent=1 // pred_fallthru
      _
    // Predicated region
    $region98: #{cabnetpp_forward.1} parent=1 // pred_check
      _
    $region99: #{cabnetpp_forward.1} parent=1 // pred_check_branch
      %177 = sbr.rel (0) target = $region101
    $region100: #{cabnetpp_forward.1} parent=1 // pred_region
      %179 = dma.done [#allocation11], 2048
    $region101: #{cabnetpp_forward.1} parent=1 // pred_fallthru
      _
    // Predicated region
    $region102: #{cabnetpp_forward.1} parent=1 // pred_check
      _
    $region103: #{cabnetpp_forward.1} parent=1 // pred_check_branch
      %181 = sbr.rel (0) target = $region105
    $region104: #{cabnetpp_forward.1} parent=1 // pred_region
      %183 = dma.done [#allocation14], 2048
    $region105: #{cabnetpp_forward.1} parent=1 // pred_fallthru
      _
    %v184 = vld [vmem:[%s0] sm:$0xff]
    %v185 = vld [vmem:[%s0 + $0x8] sm:$0xff]
    %v186 = vld [vmem:[%s0 + $0x10] sm:$0xff]
    %v187 = vld [vmem:[%s0 + $0x18] sm:$0xff]
    %v188 = vld [vmem:[%s0 + $0x20] sm:$0xff]
    %v189 = vld [vmem:[%s0 + $0x28] sm:$0xff]
    %v190 = vld [vmem:[%s0 + $0x30] sm:$0xff]
    %v191 = vld [vmem:[%s0 + $0x38] sm:$0xff]
    %v192 = vld [vmem:[%s0 + $0x40] sm:$0xff]
    %v193 = vld [vmem:[%s0 + $0x48] sm:$0xff]
    %v194 = vld [vmem:[%s0 + $0x50] sm:$0xff]
    %v195 = vld [vmem:[%s0 + $0x58] sm:$0xff]
    %v196 = vld [vmem:[%s0 + $0x60] sm:$0xff]
    %v197 = vld [vmem:[%s0 + $0x68] sm:$0xff]
    %v198 = vld [vmem:[%s0 + $0x70] sm:$0xff]
    %v199 = vld [vmem:[%s0 + $0x78] sm:$0xff]
    %v200 = vld [vmem:[%s1] sm:$0x3]
    %201 = vmatpush.msra.mxu0 %v199
    %202 = vmatpush.msra.mxu0 %v198
    %203 = vmatpush.msra.mxu0 %v197
    %204 = vmatpush.msra.mxu0 %v196
    %205 = vmatpush.msra.mxu0 %v195
    %206 = vmatpush.msra.mxu0 %v194
    %207 = vmatpush.msra.mxu0 %v193
    %208 = vmatpush.msra.mxu0 %v192
    %209 = vmatpush.msra.mxu0 %v191
    %210 = vmatpush.msra.mxu0 %v190
    %211 = vmatpush.msra.mxu0 %v189
    %212 = vmatpush.msra.mxu0 %v188
    %213 = vmatpush.msra.mxu0 %v187
    %214 = vmatpush.msra.mxu0 %v186
    %215 = vmatpush.msra.mxu0 %v185
    %216 = vmatpush.msra.mxu0 %v184
    %217 = vmatmul.f32.gmra.mxu0 %v200
    %v218 = vpop.f32.mrf.mxu0
    %v219 = vadd.f32 0.0, %v218
    %220 = vdwg.mxu0
    %v221 = vld [vmem:[#allocation4] sm:$0xff]
    %v222 = vld [vmem:[#allocation4 + $0x8] sm:$0xff]
    %v223 = vld [vmem:[#allocation4 + $0x10] sm:$0xff]
    %v224 = vld [vmem:[#allocation4 + $0x18] sm:$0xff]
    %v225 = vld [vmem:[#allocation4 + $0x20] sm:$0xff]
    %v226 = vld [vmem:[#allocation4 + $0x28] sm:$0xff]
    %v227 = vld [vmem:[#allocation4 + $0x30] sm:$0xff]
    %v228 = vld [vmem:[#allocation4 + $0x38] sm:$0xff]
    %v229 = vld [vmem:[#allocation4 + $0x40] sm:$0xff]
    %v230 = vld [vmem:[#allocation4 + $0x48] sm:$0xff]
    %v231 = vld [vmem:[#allocation4 + $0x50] sm:$0xff]
    %v232 = vld [vmem:[#allocation4 + $0x58] sm:$0xff]
    %v233 = vld [vmem:[#allocation4 + $0x60] sm:$0xff]
    %v234 = vld [vmem:[#allocation4 + $0x68] sm:$0xff]
    %v235 = vld [vmem:[#allocation4 + $0x70] sm:$0xff]
    %v236 = vld [vmem:[#allocation4 + $0x78] sm:$0xff]
    %v237 = vld [vmem:[%s4] sm:$0x1]
    %v239 = vperm.slane %v237, 0
    %241 = vmatpush.msra.mxu0 %v236
    %242 = vmatpush.msra.mxu0 %v235
    %243 = vmatpush.msra.mxu0 %v234
    %244 = vmatpush.msra.mxu0 %v233
    %245 = vmatpush.msra.mxu0 %v232
    %246 = vmatpush.msra.mxu0 %v231
    %247 = vmatpush.msra.mxu0 %v230
    %248 = vmatpush.msra.mxu0 %v229
    %249 = vmatpush.msra.mxu0 %v228
    %250 = vmatpush.msra.mxu0 %v227
    %251 = vmatpush.msra.mxu0 %v226
    %252 = vmatpush.msra.mxu0 %v225
    %253 = vmatpush.msra.mxu0 %v224
    %254 = vmatpush.msra.mxu0 %v223
    %255 = vmatpush.msra.mxu0 %v222
    %256 = vmatpush.msra.mxu0 %v221
    %257 = vmatmul.f32.gmra.mxu0 %v219
    %v258 = vpop.f32.mrf.mxu0
    %v259 = vadd.f32 %v239, %v258
    %260 = vdwg.mxu0
    %v261 = vmax.f32 %v259, 0.0
    %v262 = vld [vmem:[#allocation6] sm:$0xff]
    %v263 = vld [vmem:[#allocation6 + $0x8] sm:$0xff]
    %v264 = vld [vmem:[#allocation6 + $0x10] sm:$0xff]
    %v265 = vld [vmem:[#allocation6 + $0x18] sm:$0xff]
    %v266 = vld [vmem:[#allocation6 + $0x20] sm:$0xff]
    %v267 = vld [vmem:[#allocation6 + $0x28] sm:$0xff]
    %v268 = vld [vmem:[#allocation6 + $0x30] sm:$0xff]
    %v269 = vld [vmem:[#allocation6 + $0x38] sm:$0xff]
    %v270 = vld [vmem:[#allocation6 + $0x40] sm:$0xff]
    %v271 = vld [vmem:[#allocation6 + $0x48] sm:$0xff]
    %v272 = vld [vmem:[#allocation6 + $0x50] sm:$0xff]
    %v273 = vld [vmem:[#allocation6 + $0x58] sm:$0xff]
    %v274 = vld [vmem:[#allocation6 + $0x60] sm:$0xff]
    %v275 = vld [vmem:[#allocation6 + $0x68] sm:$0xff]
    %v276 = vld [vmem:[#allocation6 + $0x70] sm:$0xff]
    %v277 = vld [vmem:[#allocation6 + $0x78] sm:$0xff]
    %v278 = vld [vmem:[%s6] sm:$0x1]
    %v280 = vperm.slane %v278, 0
    %282 = vmatpush.msra.mxu0 %v277
    %283 = vmatpush.msra.mxu0 %v276
    %284 = vmatpush.msra.mxu0 %v275
    %285 = vmatpush.msra.mxu0 %v274
    %286 = vmatpush.msra.mxu0 %v273
    %287 = vmatpush.msra.mxu0 %v272
    %288 = vmatpush.msra.mxu0 %v271
    %289 = vmatpush.msra.mxu0 %v270
    %290 = vmatpush.msra.mxu0 %v269
    %291 = vmatpush.msra.mxu0 %v268
    %292 = vmatpush.msra.mxu0 %v267
    %293 = vmatpush.msra.mxu0 %v266
    %294 = vmatpush.msra.mxu0 %v265
    %295 = vmatpush.msra.mxu0 %v264
    %296 = vmatpush.msra.mxu0 %v263
    %297 = vmatpush.msra.mxu0 %v262
    %298 = vmatmul.f32.gmra.mxu0 %v261
    %v299 = vpop.f32.mrf.mxu0
    %v300 = vadd.f32 %v280, %v299
    %301 = vdwg.mxu0
    %v302 = vxor.u32 %v300, 2147483648
    %v303 = vmul.f32 %v302, 1.442695
    %v304 = vpow.pop %v303
    %v305 = vadd.f32 %v304, 1.0
    %v306 = vrcp.pop %v305
    %v307 = vmul.f32 %v305, %v306
    %v308 = vsub.f32 1.0, %v307
    %v309 = vmul.f32 %v306, %v308
    %v310 = vadd.f32 %v306, %v309
    %vm311 = vweird.f32 %v305
    %vm312 = vweird.f32 %v306
    %vm313 = vmor %vm311, %vm312
    %v314 = vsel %vm313, %v306, %v310
    %v315 = vand.u32 2147483647, %v305
    %vm316 = vcmp.eq.f32.partialorder %v315, 8.507059e+37
    %v317 = vand.u32 %v305, 2147483648
    %v318 = vor.u32 1.1754944e-38, %v317
    %v319 = vsel %vm316, %v318, %v314
    %v320 = vmul.f32 1.0, %v319
    %v321 = vld [vmem:[#allocation2] sm:$0xff]
    %v322 = vld [vmem:[#allocation2 + $0x8] sm:$0xff]
    %v323 = vld [vmem:[#allocation2 + $0x10] sm:$0xff]
    %v324 = vld [vmem:[#allocation2 + $0x18] sm:$0xff]
    %v325 = vld [vmem:[#allocation2 + $0x20] sm:$0xff]
    %v326 = vld [vmem:[#allocation2 + $0x28] sm:$0xff]
    %v327 = vld [vmem:[#allocation2 + $0x30] sm:$0xff]
    %v328 = vld [vmem:[#allocation2 + $0x38] sm:$0xff]
    %v329 = vld [vmem:[#allocation2 + $0x40] sm:$0xff]
    %v330 = vld [vmem:[#allocation2 + $0x48] sm:$0xff]
    %v331 = vld [vmem:[#allocation2 + $0x50] sm:$0xff]
    %v332 = vld [vmem:[#allocation2 + $0x58] sm:$0xff]
    %v333 = vld [vmem:[#allocation2 + $0x60] sm:$0xff]
    %v334 = vld [vmem:[#allocation2 + $0x68] sm:$0xff]
    %v335 = vld [vmem:[#allocation2 + $0x70] sm:$0xff]
    %v336 = vld [vmem:[#allocation2 + $0x78] sm:$0xff]
    %vm337 = vcmask 15360
    %v339 = vsel %vm337, %v321, 0
    %v342 = vsel %vm337, %v322, 0
    %v345 = vsel %vm337, %v323, 0
    %v348 = vsel %vm337, %v324, 0
    %v351 = vsel %vm337, %v325, 0
    %v354 = vsel %vm337, %v326, 0
    %v357 = vsel %vm337, %v327, 0
    %v360 = vsel %vm337, %v328, 0
    %v363 = vsel %vm337, %v329, 0
    %v366 = vsel %vm337, %v330, 0
    %v369 = vsel %vm337, %v331, 0
    %v372 = vsel %vm337, %v332, 0
    %v375 = vsel %vm337, %v333, 0
    %v378 = vsel %vm337, %v334, 0
    %v381 = vsel %vm337, %v335, 0
    %v384 = vsel %vm337, %v336, 0
    %vm386 = vcmask 1041408
    %v388 = vsel %vm386, %v320, 0
    %390 = vmatpush.msra.mxu0 0.0
    %391 = vmatpush.msra.mxu0 0.0
    %392 = vmatpush.msra.mxu0 0.0
    %393 = vmatpush.msra.mxu0 0.0
    %394 = vmatpush.msra.mxu0 0.0
    %395 = vmatpush.msra.mxu0 0.0
    %396 = vmatpush.msra.mxu0 0.0
    %397 = vmatpush.msra.mxu0 0.0
    %398 = vmatpush.msra.mxu0 0.0
    %399 = vmatpush.msra.mxu0 0.0
    %400 = vmatpush.msra.mxu0 0.0
    %401 = vmatpush.msra.mxu0 0.0
    %402 = vmatpush.msra.mxu0 0.0
    %403 = vmatpush.msra.mxu0 0.0
    %404 = vmatpush.msra.mxu0 0.0
    %405 = vmatpush.msra.mxu0 %v388
    %406 = vmatmul.f32.gmra.mxu0 %v339
    %v407 = vpop.f32.mrf.mxu0
    %v408 = vadd.f32 0.0, %v407
    %409 = vmatmul.f32.gmra.mxu0 %v342
    %v410 = vpop.f32.mrf.mxu0
    %v411 = vadd.f32 0.0, %v410
    %412 = vmatmul.f32.gmra.mxu0 %v345
    %v413 = vpop.f32.mrf.mxu0
    %v414 = vadd.f32 0.0, %v413
    %415 = vmatmul.f32.gmra.mxu0 %v348
    %v416 = vpop.f32.mrf.mxu0
    %v417 = vadd.f32 0.0, %v416
    %418 = vmatmul.f32.gmra.mxu0 %v351
    %v419 = vpop.f32.mrf.mxu0
    %v420 = vadd.f32 0.0, %v419
    %421 = vmatmul.f32.gmra.mxu0 %v354
    %v422 = vpop.f32.mrf.mxu0
    %v423 = vadd.f32 0.0, %v422
    %424 = vmatmul.f32.gmra.mxu0 %v357
    %v425 = vpop.f32.mrf.mxu0
    %v426 = vadd.f32 0.0, %v425
    %427 = vmatmul.f32.gmra.mxu0 %v360
    %v428 = vpop.f32.mrf.mxu0
    %v429 = vadd.f32 0.0, %v428
    %430 = vmatmul.f32.gmra.mxu0 %v363
    %v431 = vpop.f32.mrf.mxu0
    %v432 = vadd.f32 0.0, %v431
    %433 = vmatmul.f32.gmra.mxu0 %v366
    %v434 = vpop.f32.mrf.mxu0
    %v435 = vadd.f32 0.0, %v434
    %436 = vmatmul.f32.gmra.mxu0 %v369
    %v437 = vpop.f32.mrf.mxu0
    %v438 = vadd.f32 0.0, %v437
    %439 = vmatmul.f32.gmra.mxu0 %v372
    %v440 = vpop.f32.mrf.mxu0
    %v441 = vadd.f32 0.0, %v440
    %442 = vmatmul.f32.gmra.mxu0 %v375
    %v443 = vpop.f32.mrf.mxu0
    %v444 = vadd.f32 0.0, %v443
    %445 = vmatmul.f32.gmra.mxu0 %v378
    %v446 = vpop.f32.mrf.mxu0
    %v447 = vadd.f32 0.0, %v446
    %448 = vmatmul.f32.gmra.mxu0 %v381
    %v449 = vpop.f32.mrf.mxu0
    %v450 = vadd.f32 0.0, %v449
    %451 = vmatmul.f32.gmra.mxu0 %v384
    %v452 = vpop.f32.mrf.mxu0
    %v453 = vadd.f32 0.0, %v452
    %454 = vdwg.mxu0
    %v455 = vmul.f32 %v184, %v408
    %v456 = vmul.f32 %v185, %v411
    %v457 = vmul.f32 %v186, %v414
    %v458 = vmul.f32 %v187, %v417
    %v459 = vmul.f32 %v188, %v420
    %v460 = vmul.f32 %v189, %v423
    %v461 = vmul.f32 %v190, %v426
    %v462 = vmul.f32 %v191, %v429
    %v463 = vmul.f32 %v192, %v432
    %v464 = vmul.f32 %v193, %v435
    %v465 = vmul.f32 %v194, %v438
    %v466 = vmul.f32 %v195, %v441
    %v467 = vmul.f32 %v196, %v444
    %v468 = vmul.f32 %v197, %v447
    %v469 = vmul.f32 %v198, %v450
    %v470 = vmul.f32 %v199, %v453
    %471 = vadd.xlane.f32.xlu0 %v455
    %v472 = vpop.xlane.xlu0 %471
    %473 = vadd.xlane.f32.xlu0 %v456
    %v474 = vpop.xlane.xlu0 %473
    %475 = vadd.xlane.f32.xlu0 %v457
    %v476 = vpop.xlane.xlu0 %475
    %477 = vadd.xlane.f32.xlu0 %v458
    %v478 = vpop.xlane.xlu0 %477
    %479 = vadd.xlane.f32.xlu0 %v459
    %v480 = vpop.xlane.xlu0 %479
    %481 = vadd.xlane.f32.xlu0 %v460
    %v482 = vpop.xlane.xlu0 %481
    %483 = vadd.xlane.f32.xlu0 %v461
    %v484 = vpop.xlane.xlu0 %483
    %485 = vadd.xlane.f32.xlu0 %v462
    %v486 = vpop.xlane.xlu0 %485
    %487 = vadd.xlane.f32.xlu0 %v463
    %v488 = vpop.xlane.xlu0 %487
    %489 = vadd.xlane.f32.xlu0 %v464
    %v490 = vpop.xlane.xlu0 %489
    %491 = vadd.xlane.f32.xlu0 %v465
    %v492 = vpop.xlane.xlu0 %491
    %493 = vadd.xlane.f32.xlu0 %v466
    %v494 = vpop.xlane.xlu0 %493
    %495 = vadd.xlane.f32.xlu0 %v467
    %v496 = vpop.xlane.xlu0 %495
    %497 = vadd.xlane.f32.xlu0 %v468
    %v498 = vpop.xlane.xlu0 %497
    %499 = vadd.xlane.f32.xlu0 %v469
    %v500 = vpop.xlane.xlu0 %499
    %501 = vadd.xlane.f32.xlu0 %v470
    %v502 = vpop.xlane.xlu0 %501
    %v503 = vrcp.pop 128.0
    %v504 = vmul.f32 128.0, %v503
    %v505 = vsub.f32 1.0, %v504
    %v506 = vmul.f32 %v503, %v505
    %v507 = vadd.f32 %v503, %v506
    %vm508 = vweird.f32 %v503
    %v509 = vsel %vm508, %v503, %v507
    %v510 = vmul.f32 %v472, %v509
    %v511 = vmul.f32 %v474, %v509
    %v512 = vmul.f32 %v476, %v509
    %v513 = vmul.f32 %v478, %v509
    %v514 = vmul.f32 %v480, %v509
    %v515 = vmul.f32 %v482, %v509
    %v516 = vmul.f32 %v484, %v509
    %v517 = vmul.f32 %v486, %v509
    %v518 = vmul.f32 %v488, %v509
    %v519 = vmul.f32 %v490, %v509
    %v520 = vmul.f32 %v492, %v509
    %v521 = vmul.f32 %v494, %v509
    %v522 = vmul.f32 %v496, %v509
    %v523 = vmul.f32 %v498, %v509
    %v524 = vmul.f32 %v500, %v509
    %v525 = vmul.f32 %v502, %v509
    %v526 = vxor.u32 %v510, 2147483648
    %v527 = vxor.u32 %v511, 2147483648
    %v528 = vxor.u32 %v512, 2147483648
    %v529 = vxor.u32 %v513, 2147483648
    %v530 = vxor.u32 %v514, 2147483648
    %v531 = vxor.u32 %v515, 2147483648
    %v532 = vxor.u32 %v516, 2147483648
    %v533 = vxor.u32 %v517, 2147483648
    %v534 = vxor.u32 %v518, 2147483648
    %v535 = vxor.u32 %v519, 2147483648
    %v536 = vxor.u32 %v520, 2147483648
    %v537 = vxor.u32 %v521, 2147483648
    %v538 = vxor.u32 %v522, 2147483648
    %v539 = vxor.u32 %v523, 2147483648
    %v540 = vxor.u32 %v524, 2147483648
    %v541 = vxor.u32 %v525, 2147483648
    %v542 = vmul.f32 %v526, 1.442695
    %v543 = vpow.pop %v542
    %v544 = vmul.f32 %v527, 1.442695
    %v545 = vpow.pop %v544
    %v546 = vmul.f32 %v528, 1.442695
    %v547 = vpow.pop %v546
    %v548 = vmul.f32 %v529, 1.442695
    %v549 = vpow.pop %v548
    %v550 = vmul.f32 %v530, 1.442695
    %v551 = vpow.pop %v550
    %v552 = vmul.f32 %v531, 1.442695
    %v553 = vpow.pop %v552
    %v554 = vmul.f32 %v532, 1.442695
    %v555 = vpow.pop %v554
    %v556 = vmul.f32 %v533, 1.442695
    %v557 = vpow.pop %v556
    %v558 = vmul.f32 %v534, 1.442695
    %v559 = vpow.pop %v558
    %v560 = vmul.f32 %v535, 1.442695
    %v561 = vpow.pop %v560
    %v562 = vmul.f32 %v536, 1.442695
    %v563 = vpow.pop %v562
    %v564 = vmul.f32 %v537, 1.442695
    %v565 = vpow.pop %v564
    %v566 = vmul.f32 %v538, 1.442695
    %v567 = vpow.pop %v566
    %v568 = vmul.f32 %v539, 1.442695
    %v569 = vpow.pop %v568
    %v570 = vmul.f32 %v540, 1.442695
    %v571 = vpow.pop %v570
    %v572 = vmul.f32 %v541, 1.442695
    %v573 = vpow.pop %v572
    %v574 = vadd.f32 %v543, 1.0
    %v575 = vadd.f32 %v545, 1.0
    %v576 = vadd.f32 %v547, 1.0
    %v577 = vadd.f32 %v549, 1.0
    %v578 = vadd.f32 %v551, 1.0
    %v579 = vadd.f32 %v553, 1.0
    %v580 = vadd.f32 %v555, 1.0
    %v581 = vadd.f32 %v557, 1.0
    %v582 = vadd.f32 %v559, 1.0
    %v583 = vadd.f32 %v561, 1.0
    %v584 = vadd.f32 %v563, 1.0
    %v585 = vadd.f32 %v565, 1.0
    %v586 = vadd.f32 %v567, 1.0
    %v587 = vadd.f32 %v569, 1.0
    %v588 = vadd.f32 %v571, 1.0
    %v589 = vadd.f32 %v573, 1.0
    %v590 = vrcp.pop %v574
    %v591 = vmul.f32 %v574, %v590
    %v592 = vsub.f32 1.0, %v591
    %v593 = vmul.f32 %v590, %v592
    %v594 = vadd.f32 %v590, %v593
    %vm595 = vweird.f32 %v574
    %vm596 = vweird.f32 %v590
    %vm597 = vmor %vm595, %vm596
    %v598 = vsel %vm597, %v590, %v594
    %v599 = vand.u32 2147483647, %v574
    %vm600 = vcmp.eq.f32.partialorder %v599, 8.507059e+37
    %v601 = vand.u32 %v574, 2147483648
    %v602 = vor.u32 1.1754944e-38, %v601
    %v603 = vsel %vm600, %v602, %v598
    %v604 = vmul.f32 1.0, %v603
    %v605 = vrcp.pop %v575
    %v606 = vmul.f32 %v575, %v605
    %v607 = vsub.f32 1.0, %v606
    %v608 = vmul.f32 %v605, %v607
    %v609 = vadd.f32 %v605, %v608
    %vm610 = vweird.f32 %v575
    %vm611 = vweird.f32 %v605
    %vm612 = vmor %vm610, %vm611
    %v613 = vsel %vm612, %v605, %v609
    %v614 = vand.u32 2147483647, %v575
    %vm615 = vcmp.eq.f32.partialorder %v614, 8.507059e+37
    %v616 = vand.u32 %v575, 2147483648
    %v617 = vor.u32 1.1754944e-38, %v616
    %v618 = vsel %vm615, %v617, %v613
    %v619 = vmul.f32 1.0, %v618
    %v620 = vrcp.pop %v576
    %v621 = vmul.f32 %v576, %v620
    %v622 = vsub.f32 1.0, %v621
    %v623 = vmul.f32 %v620, %v622
    %v624 = vadd.f32 %v620, %v623
    %vm625 = vweird.f32 %v576
    %vm626 = vweird.f32 %v620
    %vm627 = vmor %vm625, %vm626
    %v628 = vsel %vm627, %v620, %v624
    %v629 = vand.u32 2147483647, %v576
    %vm630 = vcmp.eq.f32.partialorder %v629, 8.507059e+37
    %v631 = vand.u32 %v576, 2147483648
    %v632 = vor.u32 1.1754944e-38, %v631
    %v633 = vsel %vm630, %v632, %v628
    %v634 = vmul.f32 1.0, %v633
    %v635 = vrcp.pop %v577
    %v636 = vmul.f32 %v577, %v635
    %v637 = vsub.f32 1.0, %v636
    %v638 = vmul.f32 %v635, %v637
    %v639 = vadd.f32 %v635, %v638
    %vm640 = vweird.f32 %v577
    %vm641 = vweird.f32 %v635
    %vm642 = vmor %vm640, %vm641
    %v643 = vsel %vm642, %v635, %v639
    %v644 = vand.u32 2147483647, %v577
    %vm645 = vcmp.eq.f32.partialorder %v644, 8.507059e+37
    %v646 = vand.u32 %v577, 2147483648
    %v647 = vor.u32 1.1754944e-38, %v646
    %v648 = vsel %vm645, %v647, %v643
    %v649 = vmul.f32 1.0, %v648
    %v650 = vrcp.pop %v578
    %v651 = vmul.f32 %v578, %v650
    %v652 = vsub.f32 1.0, %v651
    %v653 = vmul.f32 %v650, %v652
    %v654 = vadd.f32 %v650, %v653
    %vm655 = vweird.f32 %v578
    %vm656 = vweird.f32 %v650
    %vm657 = vmor %vm655, %vm656
    %v658 = vsel %vm657, %v650, %v654
    %v659 = vand.u32 2147483647, %v578
    %vm660 = vcmp.eq.f32.partialorder %v659, 8.507059e+37
    %v661 = vand.u32 %v578, 2147483648
    %v662 = vor.u32 1.1754944e-38, %v661
    %v663 = vsel %vm660, %v662, %v658
    %v664 = vmul.f32 1.0, %v663
    %v665 = vrcp.pop %v579
    %v666 = vmul.f32 %v579, %v665
    %v667 = vsub.f32 1.0, %v666
    %v668 = vmul.f32 %v665, %v667
    %v669 = vadd.f32 %v665, %v668
    %vm670 = vweird.f32 %v579
    %vm671 = vweird.f32 %v665
    %vm672 = vmor %vm670, %vm671
    %v673 = vsel %vm672, %v665, %v669
    %v674 = vand.u32 2147483647, %v579
    %vm675 = vcmp.eq.f32.partialorder %v674, 8.507059e+37
    %v676 = vand.u32 %v579, 2147483648
    %v677 = vor.u32 1.1754944e-38, %v676
    %v678 = vsel %vm675, %v677, %v673
    %v679 = vmul.f32 1.0, %v678
    %v680 = vrcp.pop %v580
    %v681 = vmul.f32 %v580, %v680
    %v682 = vsub.f32 1.0, %v681
    %v683 = vmul.f32 %v680, %v682
    %v684 = vadd.f32 %v680, %v683
    %vm685 = vweird.f32 %v580
    %vm686 = vweird.f32 %v680
    %vm687 = vmor %vm685, %vm686
    %v688 = vsel %vm687, %v680, %v684
    %v689 = vand.u32 2147483647, %v580
    %vm690 = vcmp.eq.f32.partialorder %v689, 8.507059e+37
    %v691 = vand.u32 %v580, 2147483648
    %v692 = vor.u32 1.1754944e-38, %v691
    %v693 = vsel %vm690, %v692, %v688
    %v694 = vmul.f32 1.0, %v693
    %v695 = vrcp.pop %v581
    %v696 = vmul.f32 %v581, %v695
    %v697 = vsub.f32 1.0, %v696
    %v698 = vmul.f32 %v695, %v697
    %v699 = vadd.f32 %v695, %v698
    %vm700 = vweird.f32 %v581
    %vm701 = vweird.f32 %v695
    %vm702 = vmor %vm700, %vm701
    %v703 = vsel %vm702, %v695, %v699
    %v704 = vand.u32 2147483647, %v581
    %vm705 = vcmp.eq.f32.partialorder %v704, 8.507059e+37
    %v706 = vand.u32 %v581, 2147483648
    %v707 = vor.u32 1.1754944e-38, %v706
    %v708 = vsel %vm705, %v707, %v703
    %v709 = vmul.f32 1.0, %v708
    %v710 = vrcp.pop %v582
    %v711 = vmul.f32 %v582, %v710
    %v712 = vsub.f32 1.0, %v711
    %v713 = vmul.f32 %v710, %v712
    %v714 = vadd.f32 %v710, %v713
    %vm715 = vweird.f32 %v582
    %vm716 = vweird.f32 %v710
    %vm717 = vmor %vm715, %vm716
    %v718 = vsel %vm717, %v710, %v714
    %v719 = vand.u32 2147483647, %v582
    %vm720 = vcmp.eq.f32.partialorder %v719, 8.507059e+37
    %v721 = vand.u32 %v582, 2147483648
    %v722 = vor.u32 1.1754944e-38, %v721
    %v723 = vsel %vm720, %v722, %v718
    %v724 = vmul.f32 1.0, %v723
    %v725 = vrcp.pop %v583
    %v726 = vmul.f32 %v583, %v725
    %v727 = vsub.f32 1.0, %v726
    %v728 = vmul.f32 %v725, %v727
    %v729 = vadd.f32 %v725, %v728
    %vm730 = vweird.f32 %v583
    %vm731 = vweird.f32 %v725
    %vm732 = vmor %vm730, %vm731
    %v733 = vsel %vm732, %v725, %v729
    %v734 = vand.u32 2147483647, %v583
    %vm735 = vcmp.eq.f32.partialorder %v734, 8.507059e+37
    %v736 = vand.u32 %v583, 2147483648
    %v737 = vor.u32 1.1754944e-38, %v736
    %v738 = vsel %vm735, %v737, %v733
    %v739 = vmul.f32 1.0, %v738
    %v740 = vrcp.pop %v584
    %v741 = vmul.f32 %v584, %v740
    %v742 = vsub.f32 1.0, %v741
    %v743 = vmul.f32 %v740, %v742
    %v744 = vadd.f32 %v740, %v743
    %vm745 = vweird.f32 %v584
    %vm746 = vweird.f32 %v740
    %vm747 = vmor %vm745, %vm746
    %v748 = vsel %vm747, %v740, %v744
    %v749 = vand.u32 2147483647, %v584
    %vm750 = vcmp.eq.f32.partialorder %v749, 8.507059e+37
    %v751 = vand.u32 %v584, 2147483648
    %v752 = vor.u32 1.1754944e-38, %v751
    %v753 = vsel %vm750, %v752, %v748
    %v754 = vmul.f32 1.0, %v753
    %v755 = vrcp.pop %v585
    %v756 = vmul.f32 %v585, %v755
    %v757 = vsub.f32 1.0, %v756
    %v758 = vmul.f32 %v755, %v757
    %v759 = vadd.f32 %v755, %v758
    %vm760 = vweird.f32 %v585
    %vm761 = vweird.f32 %v755
    %vm762 = vmor %vm760, %vm761
    %v763 = vsel %vm762, %v755, %v759
    %v764 = vand.u32 2147483647, %v585
    %vm765 = vcmp.eq.f32.partialorder %v764, 8.507059e+37
    %v766 = vand.u32 %v585, 2147483648
    %v767 = vor.u32 1.1754944e-38, %v766
    %v768 = vsel %vm765, %v767, %v763
    %v769 = vmul.f32 1.0, %v768
    %v770 = vrcp.pop %v586
    %v771 = vmul.f32 %v586, %v770
    %v772 = vsub.f32 1.0, %v771
    %v773 = vmul.f32 %v770, %v772
    %v774 = vadd.f32 %v770, %v773
    %vm775 = vweird.f32 %v586
    %vm776 = vweird.f32 %v770
    %vm777 = vmor %vm775, %vm776
    %v778 = vsel %vm777, %v770, %v774
    %v779 = vand.u32 2147483647, %v586
    %vm780 = vcmp.eq.f32.partialorder %v779, 8.507059e+37
    %v781 = vand.u32 %v586, 2147483648
    %v782 = vor.u32 1.1754944e-38, %v781
    %v783 = vsel %vm780, %v782, %v778
    %v784 = vmul.f32 1.0, %v783
    %v785 = vrcp.pop %v587
    %v786 = vmul.f32 %v587, %v785
    %v787 = vsub.f32 1.0, %v786
    %v788 = vmul.f32 %v785, %v787
    %v789 = vadd.f32 %v785, %v788
    %vm790 = vweird.f32 %v587
    %vm791 = vweird.f32 %v785
    %vm792 = vmor %vm790, %vm791
    %v793 = vsel %vm792, %v785, %v789
    %v794 = vand.u32 2147483647, %v587
    %vm795 = vcmp.eq.f32.partialorder %v794, 8.507059e+37
    %v796 = vand.u32 %v587, 2147483648
    %v797 = vor.u32 1.1754944e-38, %v796
    %v798 = vsel %vm795, %v797, %v793
    %v799 = vmul.f32 1.0, %v798
    %v800 = vrcp.pop %v588
    %v801 = vmul.f32 %v588, %v800
    %v802 = vsub.f32 1.0, %v801
    %v803 = vmul.f32 %v800, %v802
    %v804 = vadd.f32 %v800, %v803
    %vm805 = vweird.f32 %v588
    %vm806 = vweird.f32 %v800
    %vm807 = vmor %vm805, %vm806
    %v808 = vsel %vm807, %v800, %v804
    %v809 = vand.u32 2147483647, %v588
    %vm810 = vcmp.eq.f32.partialorder %v809, 8.507059e+37
    %v811 = vand.u32 %v588, 2147483648
    %v812 = vor.u32 1.1754944e-38, %v811
    %v813 = vsel %vm810, %v812, %v808
    %v814 = vmul.f32 1.0, %v813
    %v815 = vrcp.pop %v589
    %v816 = vmul.f32 %v589, %v815
    %v817 = vsub.f32 1.0, %v816
    %v818 = vmul.f32 %v815, %v817
    %v819 = vadd.f32 %v815, %v818
    %vm820 = vweird.f32 %v589
    %vm821 = vweird.f32 %v815
    %vm822 = vmor %vm820, %vm821
    %v823 = vsel %vm822, %v815, %v819
    %v824 = vand.u32 2147483647, %v589
    %vm825 = vcmp.eq.f32.partialorder %v824, 8.507059e+37
    %v826 = vand.u32 %v589, 2147483648
    %v827 = vor.u32 1.1754944e-38, %v826
    %v828 = vsel %vm825, %v827, %v823
    %v829 = vmul.f32 1.0, %v828
    %v830 = vmul.f32 %v455, %v604
    %v831 = vmul.f32 %v456, %v619
    %v832 = vmul.f32 %v457, %v634
    %v833 = vmul.f32 %v458, %v649
    %v834 = vmul.f32 %v459, %v664
    %v835 = vmul.f32 %v460, %v679
    %v836 = vmul.f32 %v461, %v694
    %v837 = vmul.f32 %v462, %v709
    %v838 = vmul.f32 %v463, %v724
    %v839 = vmul.f32 %v464, %v739
    %v840 = vmul.f32 %v465, %v754
    %v841 = vmul.f32 %v466, %v769
    %v842 = vmul.f32 %v467, %v784
    %v843 = vmul.f32 %v468, %v799
    %v844 = vmul.f32 %v469, %v814
    %v845 = vmul.f32 %v470, %v829
    %v846 = vld [vmem:[%s7] sm:$0xff]
    %v847 = vld [vmem:[%s7 + $0x8] sm:$0xff]
    %v848 = vld [vmem:[%s7 + $0x10] sm:$0xff]
    %v849 = vld [vmem:[%s7 + $0x18] sm:$0xff]
    %v850 = vld [vmem:[%s7 + $0x20] sm:$0xff]
    %v851 = vld [vmem:[%s7 + $0x28] sm:$0xff]
    %v852 = vld [vmem:[%s7 + $0x30] sm:$0xff]
    %v853 = vld [vmem:[%s7 + $0x38] sm:$0xff]
    %v854 = vld [vmem:[%s7 + $0x40] sm:$0xff]
    %v855 = vld [vmem:[%s7 + $0x48] sm:$0xff]
    %v856 = vld [vmem:[%s7 + $0x50] sm:$0xff]
    %v857 = vld [vmem:[%s7 + $0x58] sm:$0xff]
    %v858 = vld [vmem:[%s7 + $0x60] sm:$0xff]
    %v859 = vld [vmem:[%s7 + $0x68] sm:$0xff]
    %v860 = vld [vmem:[%s7 + $0x70] sm:$0xff]
    %v861 = vld [vmem:[%s7 + $0x78] sm:$0xff]
    %862 = vmatpush.msra.mxu0 %v861
    %863 = vmatpush.msra.mxu0 %v860
    %864 = vmatpush.msra.mxu0 %v859
    %865 = vmatpush.msra.mxu0 %v858
    %866 = vmatpush.msra.mxu0 %v857
    %867 = vmatpush.msra.mxu0 %v856
    %868 = vmatpush.msra.mxu0 %v855
    %869 = vmatpush.msra.mxu0 %v854
    %870 = vmatpush.msra.mxu0 %v853
    %871 = vmatpush.msra.mxu0 %v852
    %872 = vmatpush.msra.mxu0 %v851
    %873 = vmatpush.msra.mxu0 %v850
    %874 = vmatpush.msra.mxu0 %v849
    %875 = vmatpush.msra.mxu0 %v848
    %876 = vmatpush.msra.mxu0 %v847
    %877 = vmatpush.msra.mxu0 %v846
    %878 = vmatmul.f32.gmra.mxu0 %v830
    %v879 = vpop.f32.mrf.mxu0
    %v880 = vadd.f32 0.0, %v879
    %881 = vmatmul.f32.gmra.mxu0 %v831
    %v882 = vpop.f32.mrf.mxu0
    %v883 = vadd.f32 0.0, %v882
    %884 = vmatmul.f32.gmra.mxu0 %v832
    %v885 = vpop.f32.mrf.mxu0
    %v886 = vadd.f32 0.0, %v885
    %887 = vmatmul.f32.gmra.mxu0 %v833
    %v888 = vpop.f32.mrf.mxu0
    %v889 = vadd.f32 0.0, %v888
    %890 = vmatmul.f32.gmra.mxu0 %v834
    %v891 = vpop.f32.mrf.mxu0
    %v892 = vadd.f32 0.0, %v891
    %893 = vmatmul.f32.gmra.mxu0 %v835
    %v894 = vpop.f32.mrf.mxu0
    %v895 = vadd.f32 0.0, %v894
    %896 = vmatmul.f32.gmra.mxu0 %v836
    %v897 = vpop.f32.mrf.mxu0
    %v898 = vadd.f32 0.0, %v897
    %899 = vmatmul.f32.gmra.mxu0 %v837
    %v900 = vpop.f32.mrf.mxu0
    %v901 = vadd.f32 0.0, %v900
    %902 = vmatmul.f32.gmra.mxu0 %v838
    %v903 = vpop.f32.mrf.mxu0
    %v904 = vadd.f32 0.0, %v903
    %905 = vmatmul.f32.gmra.mxu0 %v839
    %v906 = vpop.f32.mrf.mxu0
    %v907 = vadd.f32 0.0, %v906
    %908 = vmatmul.f32.gmra.mxu0 %v840
    %v909 = vpop.f32.mrf.mxu0
    %v910 = vadd.f32 0.0, %v909
    %911 = vmatmul.f32.gmra.mxu0 %v841
    %v912 = vpop.f32.mrf.mxu0
    %v913 = vadd.f32 0.0, %v912
    %914 = vmatmul.f32.gmra.mxu0 %v842
    %v915 = vpop.f32.mrf.mxu0
    %v916 = vadd.f32 0.0, %v915
    %917 = vmatmul.f32.gmra.mxu0 %v843
    %v918 = vpop.f32.mrf.mxu0
    %v919 = vadd.f32 0.0, %v918
    %920 = vmatmul.f32.gmra.mxu0 %v844
    %v921 = vpop.f32.mrf.mxu0
    %v922 = vadd.f32 0.0, %v921
    %923 = vmatmul.f32.gmra.mxu0 %v845
    %v924 = vpop.f32.mrf.mxu0
    %v925 = vadd.f32 0.0, %v924
    %926 = vdwg.mxu0
    %v927 = vld [vmem:[%s8] sm:$0x1]
    %v929 = vperm.slane %v927, 0
    %v931 = vmul.f32 %v880, %v929
    %v932 = vmul.f32 %v883, %v929
    %v933 = vmul.f32 %v886, %v929
    %v934 = vmul.f32 %v889, %v929
    %v935 = vmul.f32 %v892, %v929
    %v936 = vmul.f32 %v895, %v929
    %v937 = vmul.f32 %v898, %v929
    %v938 = vmul.f32 %v901, %v929
    %v939 = vmul.f32 %v904, %v929
    %v940 = vmul.f32 %v907, %v929
    %v941 = vmul.f32 %v910, %v929
    %v942 = vmul.f32 %v913, %v929
    %v943 = vmul.f32 %v916, %v929
    %v944 = vmul.f32 %v919, %v929
    %v945 = vmul.f32 %v922, %v929
    %v946 = vmul.f32 %v925, %v929
    %v947 = vld [vmem:[%s9] sm:$0x1]
    %v949 = vperm.slane %v947, 0
    %v951 = vadd.f32 %v931, %v949
    %v952 = vadd.f32 %v932, %v949
    %v953 = vadd.f32 %v933, %v949
    %v954 = vadd.f32 %v934, %v949
    %v955 = vadd.f32 %v935, %v949
    %v956 = vadd.f32 %v936, %v949
    %v957 = vadd.f32 %v937, %v949
    %v958 = vadd.f32 %v938, %v949
    %v959 = vadd.f32 %v939, %v949
    %v960 = vadd.f32 %v940, %v949
    %v961 = vadd.f32 %v941, %v949
    %v962 = vadd.f32 %v942, %v949
    %v963 = vadd.f32 %v943, %v949
    %v964 = vadd.f32 %v944, %v949
    %v965 = vadd.f32 %v945, %v949
    %v966 = vadd.f32 %v946, %v949
    %v967 = vmax.f32 %v951, 0.0
    %v968 = vmax.f32 %v952, 0.0
    %v969 = vmax.f32 %v953, 0.0
    %v970 = vmax.f32 %v954, 0.0
    %v971 = vmax.f32 %v955, 0.0
    %v972 = vmax.f32 %v956, 0.0
    %v973 = vmax.f32 %v957, 0.0
    %v974 = vmax.f32 %v958, 0.0
    %v975 = vmax.f32 %v959, 0.0
    %v976 = vmax.f32 %v960, 0.0
    %v977 = vmax.f32 %v961, 0.0
    %v978 = vmax.f32 %v962, 0.0
    %v979 = vmax.f32 %v963, 0.0
    %v980 = vmax.f32 %v964, 0.0
    %v981 = vmax.f32 %v965, 0.0
    %v982 = vmax.f32 %v966, 0.0
    %vm983 = vcmask 203776
    %v984 = vsel %vm983, %v967, -inf
    %v985 = vsel %vm983, %v968, -inf
    %v986 = vsel %vm983, %v969, -inf
    %v987 = vsel %vm983, %v970, -inf
    %v988 = vsel %vm983, %v971, -inf
    %v989 = vmax.f32 %v984, %v988
    %v990 = vsel %vm983, %v972, -inf
    %v991 = vmax.f32 %v985, %v990
    %v992 = vsel %vm983, %v973, -inf
    %v993 = vmax.f32 %v986, %v992
    %v994 = vsel %vm983, %v974, -inf
    %v995 = vmax.f32 %v987, %v994
    %v996 = vmax.f32 %v989, %v991
    %v997 = vmax.f32 %v993, %v995
    %v998 = vmax.f32 %v996, %v997
    %v999 = vrot.slane %v998, 4
    %v1000 = vmax.f32 %v998, %v999
    %v1001 = vrot.slane %v1000, 2
    %v1002 = vmax.f32 %v1000, %v1001
    %v1003 = vrot.slane %v1002, 1
    %v1004 = vmax.f32 %v1002, %v1003
    %v1005 = vld [vmem:[%s10] sm:$0xff]
    %v1006 = vld [vmem:[%s10 + $0x8] sm:$0xff]
    %v1007 = vld [vmem:[%s10 + $0x10] sm:$0xff]
    %v1008 = vld [vmem:[%s10 + $0x18] sm:$0x1]
    %v1010 = vsel %vm983, %v1004, 0
    %vm1012 = vcmask 1040384
    %v1014 = vsel %vm1012, %v1008, 0
    %1016 = vmatpush.msra.mxu0 0.0
    %1017 = vmatpush.msra.mxu0 0.0
    %1018 = vmatpush.msra.mxu0 0.0
    %1019 = vmatpush.msra.mxu0 0.0
    %1020 = vmatpush.msra.mxu0 0.0
    %1021 = vmatpush.msra.mxu0 0.0
    %1022 = vmatpush.msra.mxu0 0.0
    %1023 = vmatpush.msra.mxu0 0.0
    %1024 = vmatpush.msra.mxu0 0.0
    %1025 = vmatpush.msra.mxu0 0.0
    %1026 = vmatpush.msra.mxu0 0.0
    %1027 = vmatpush.msra.mxu0 0.0
    %1028 = vmatpush.msra.mxu0 %v1014
    %1029 = vmatpush.msra.mxu0 %v1007
    %1030 = vmatpush.msra.mxu0 %v1006
    %1031 = vmatpush.msra.mxu0 %v1005
    %1032 = vmatmul.f32.gmra.mxu0 %v1010
    %v1033 = vpop.f32.mrf.mxu0
    %v1034 = vadd.f32 0.0, %v1033
    %1035 = vdwg.mxu0
    %v1036 = vld [vmem:[#allocation7] sm:$0xff]
    %v1037 = vld [vmem:[#allocation7 + $0x8] sm:$0xff]
    %v1038 = vld [vmem:[#allocation7 + $0x10] sm:$0xff]
    %v1039 = vld [vmem:[#allocation7 + $0x18] sm:$0xff]
    %v1040 = vld [vmem:[#allocation7 + $0x20] sm:$0xff]
    %v1041 = vld [vmem:[#allocation7 + $0x28] sm:$0xff]
    %v1042 = vld [vmem:[#allocation7 + $0x30] sm:$0xff]
    %v1043 = vld [vmem:[#allocation7 + $0x38] sm:$0xff]
    %s1045 = vtos %v1034
    %v1046 = vstv %s1045
    %v1048 = vmul.f32 %v1046, %v1036
    %v1049 = vmul.f32 %v1046, %v1037
    %v1050 = vmul.f32 %v1046, %v1038
    %v1051 = vmul.f32 %v1046, %v1039
    %v1052 = vmul.f32 %v1046, %v1040
    %v1053 = vmul.f32 %v1046, %v1041
    %v1054 = vmul.f32 %v1046, %v1042
    %v1055 = vmul.f32 %v1046, %v1043
    %v1056 = vadd.f32 %v1048, 0.0
    %v1057 = vadd.f32 %v1049, 0.0
    %v1058 = vadd.f32 %v1050, 0.0
    %v1059 = vadd.f32 %v1051, 0.0
    %v1060 = vadd.f32 %v1052, 0.0
    %v1061 = vadd.f32 %v1053, 0.0
    %v1062 = vadd.f32 %v1054, 0.0
    %v1063 = vadd.f32 %v1055, 0.0
    %s1064 = scalar_lea.vmem [#allocation7], 64
    %v1065 = vld [vmem:[%s1064] sm:$0xff]
    %v1066 = vld [vmem:[%s1064 + $0x8] sm:$0xff]
    %v1067 = vld [vmem:[%s1064 + $0x10] sm:$0xff]
    %v1068 = vld [vmem:[%s1064 + $0x18] sm:$0xff]
    %v1069 = vld [vmem:[%s1064 + $0x20] sm:$0xff]
    %v1070 = vld [vmem:[%s1064 + $0x28] sm:$0xff]
    %v1071 = vld [vmem:[%s1064 + $0x30] sm:$0xff]
    %v1072 = vld [vmem:[%s1064 + $0x38] sm:$0xff]
    %1073 = vrot.lane.b32.xlu0 %v1034, 127
    %v1074 = vpop.permute.xlu0 %1073
    %s1075 = vtos %v1074
    %v1076 = vstv %s1075
    %v1078 = vmul.f32 %v1076, %v1065
    %v1079 = vmul.f32 %v1076, %v1066
    %v1080 = vmul.f32 %v1076, %v1067
    %v1081 = vmul.f32 %v1076, %v1068
    %v1082 = vmul.f32 %v1076, %v1069
    %v1083 = vmul.f32 %v1076, %v1070
    %v1084 = vmul.f32 %v1076, %v1071
    %v1085 = vmul.f32 %v1076, %v1072
    %v1086 = vadd.f32 %v1056, %v1078
    %v1087 = vadd.f32 %v1057, %v1079
    %v1088 = vadd.f32 %v1058, %v1080
    %v1089 = vadd.f32 %v1059, %v1081
    %v1090 = vadd.f32 %v1060, %v1082
    %v1091 = vadd.f32 %v1061, %v1083
    %v1092 = vadd.f32 %v1062, %v1084
    %v1093 = vadd.f32 %v1063, %v1085
    %s1094 = scalar_lea.vmem [#allocation7], 128
    %v1095 = vld [vmem:[%s1094] sm:$0xff]
    %v1096 = vld [vmem:[%s1094 + $0x8] sm:$0xff]
    %v1097 = vld [vmem:[%s1094 + $0x10] sm:$0xff]
    %v1098 = vld [vmem:[%s1094 + $0x18] sm:$0xff]
    %v1099 = vld [vmem:[%s1094 + $0x20] sm:$0xff]
    %v1100 = vld [vmem:[%s1094 + $0x28] sm:$0xff]
    %v1101 = vld [vmem:[%s1094 + $0x30] sm:$0xff]
    %v1102 = vld [vmem:[%s1094 + $0x38] sm:$0xff]
    %1103 = vrot.lane.b32.xlu0 %v1034, 126
    %v1104 = vpop.permute.xlu0 %1103
    %s1105 = vtos %v1104
    %v1106 = vstv %s1105
    %v1108 = vmul.f32 %v1106, %v1095
    %v1109 = vmul.f32 %v1106, %v1096
    %v1110 = vmul.f32 %v1106, %v1097
    %v1111 = vmul.f32 %v1106, %v1098
    %v1112 = vmul.f32 %v1106, %v1099
    %v1113 = vmul.f32 %v1106, %v1100
    %v1114 = vmul.f32 %v1106, %v1101
    %v1115 = vmul.f32 %v1106, %v1102
    %v1116 = vadd.f32 %v1086, %v1108
    %v1117 = vadd.f32 %v1087, %v1109
    %v1118 = vadd.f32 %v1088, %v1110
    %v1119 = vadd.f32 %v1089, %v1111
    %v1120 = vadd.f32 %v1090, %v1112
    %v1121 = vadd.f32 %v1091, %v1113
    %v1122 = vadd.f32 %v1092, %v1114
    %v1123 = vadd.f32 %v1093, %v1115
    %s1124 = scalar_lea.vmem [#allocation7], 192
    %v1125 = vld [vmem:[%s1124] sm:$0xff]
    %v1126 = vld [vmem:[%s1124 + $0x8] sm:$0xff]
    %v1127 = vld [vmem:[%s1124 + $0x10] sm:$0xff]
    %v1128 = vld [vmem:[%s1124 + $0x18] sm:$0xff]
    %v1129 = vld [vmem:[%s1124 + $0x20] sm:$0xff]
    %v1130 = vld [vmem:[%s1124 + $0x28] sm:$0xff]
    %v1131 = vld [vmem:[%s1124 + $0x30] sm:$0xff]
    %v1132 = vld [vmem:[%s1124 + $0x38] sm:$0xff]
    %1133 = vrot.lane.b32.xlu0 %v1034, 125
    %v1134 = vpop.permute.xlu0 %1133
    %s1135 = vtos %v1134
    %v1136 = vstv %s1135
    %v1138 = vmul.f32 %v1136, %v1125
    %v1139 = vmul.f32 %v1136, %v1126
    %v1140 = vmul.f32 %v1136, %v1127
    %v1141 = vmul.f32 %v1136, %v1128
    %v1142 = vmul.f32 %v1136, %v1129
    %v1143 = vmul.f32 %v1136, %v1130
    %v1144 = vmul.f32 %v1136, %v1131
    %v1145 = vmul.f32 %v1136, %v1132
    %v1146 = vadd.f32 %v1116, %v1138
    %v1147 = vadd.f32 %v1117, %v1139
    %v1148 = vadd.f32 %v1118, %v1140
    %v1149 = vadd.f32 %v1119, %v1141
    %v1150 = vadd.f32 %v1120, %v1142
    %v1151 = vadd.f32 %v1121, %v1143
    %v1152 = vadd.f32 %v1122, %v1144
    %v1153 = vadd.f32 %v1123, %v1145
    %s1154 = scalar_lea.vmem [#allocation7], 256
    %v1155 = vld [vmem:[%s1154] sm:$0xff]
    %v1156 = vld [vmem:[%s1154 + $0x8] sm:$0xff]
    %v1157 = vld [vmem:[%s1154 + $0x10] sm:$0xff]
    %v1158 = vld [vmem:[%s1154 + $0x18] sm:$0xff]
    %v1159 = vld [vmem:[%s1154 + $0x20] sm:$0xff]
    %v1160 = vld [vmem:[%s1154 + $0x28] sm:$0xff]
    %v1161 = vld [vmem:[%s1154 + $0x30] sm:$0xff]
    %v1162 = vld [vmem:[%s1154 + $0x38] sm:$0xff]
    %1163 = vrot.lane.b32.xlu0 %v1034, 124
    %v1164 = vpop.permute.xlu0 %1163
    %s1165 = vtos %v1164
    %v1166 = vstv %s1165
    %v1168 = vmul.f32 %v1166, %v1155
    %v1169 = vmul.f32 %v1166, %v1156
    %v1170 = vmul.f32 %v1166, %v1157
    %v1171 = vmul.f32 %v1166, %v1158
    %v1172 = vmul.f32 %v1166, %v1159
    %v1173 = vmul.f32 %v1166, %v1160
    %v1174 = vmul.f32 %v1166, %v1161
    %v1175 = vmul.f32 %v1166, %v1162
    %v1176 = vadd.f32 %v1146, %v1168
    %v1177 = vadd.f32 %v1147, %v1169
    %v1178 = vadd.f32 %v1148, %v1170
    %v1179 = vadd.f32 %v1149, %v1171
    %v1180 = vadd.f32 %v1150, %v1172
    %v1181 = vadd.f32 %v1151, %v1173
    %v1182 = vadd.f32 %v1152, %v1174
    %v1183 = vadd.f32 %v1153, %v1175
    %v1184 = vmul.f32 %v967, %v1176
    %v1185 = vmul.f32 %v968, %v1177
    %v1186 = vmul.f32 %v969, %v1178
    %v1187 = vmul.f32 %v970, %v1179
    %v1188 = vmul.f32 %v971, %v1180
    %v1189 = vmul.f32 %v972, %v1181
    %v1190 = vmul.f32 %v973, %v1182
    %v1191 = vmul.f32 %v974, %v1183
    %v1192 = vld [vmem:[#allocation9] sm:$0xff]
    %v1193 = vld [vmem:[#allocation9 + $0x8] sm:$0xff]
    %v1194 = vld [vmem:[#allocation9 + $0x10] sm:$0xff]
    %v1195 = vld [vmem:[#allocation9 + $0x18] sm:$0xff]
    %v1196 = vld [vmem:[#allocation9 + $0x20] sm:$0xff]
    %v1197 = vld [vmem:[#allocation9 + $0x28] sm:$0xff]
    %v1198 = vld [vmem:[#allocation9 + $0x30] sm:$0xff]
    %v1199 = vld [vmem:[#allocation9 + $0x38] sm:$0xff]
    %v1200 = vmul.f32 %v1184, %v1192
    %v1201 = vmul.f32 %v1185, %v1193
    %v1202 = vmul.f32 %v1186, %v1194
    %v1203 = vmul.f32 %v1187, %v1195
    %v1204 = vmul.f32 %v1188, %v1196
    %v1205 = vmul.f32 %v1189, %v1197
    %v1206 = vmul.f32 %v1190, %v1198
    %v1207 = vmul.f32 %v1191, %v1199
    %v1208 = vsel %vm983, %v1200, 0.0
    %v1209 = vsel %vm983, %v1201, 0.0
    %v1210 = vadd.f32 %v1208, %v1209
    %v1211 = vsel %vm983, %v1202, 0.0
    %v1212 = vadd.f32 %v1210, %v1211
    %v1213 = vsel %vm983, %v1203, 0.0
    %v1214 = vadd.f32 %v1212, %v1213
    %v1215 = vsel %vm983, %v1204, 0.0
    %v1216 = vadd.f32 %v1214, %v1215
    %v1217 = vsel %vm983, %v1205, 0.0
    %v1218 = vadd.f32 %v1216, %v1217
    %v1219 = vsel %vm983, %v1206, 0.0
    %v1220 = vadd.f32 %v1218, %v1219
    %v1221 = vsel %vm983, %v1207, 0.0
    %v1222 = vadd.f32 %v1220, %v1221
    %v1223 = vrot.slane %v1222, 4
    %v1224 = vadd.f32 %v1222, %v1223
    %v1225 = vrot.slane %v1224, 2
    %v1226 = vadd.f32 %v1224, %v1225
    %v1227 = vrot.slane %v1226, 1
    %v1228 = vadd.f32 %v1226, %v1227
    %v1229 = vld [vmem:[#allocation10] sm:$0xff]
    %v1230 = vld [vmem:[#allocation10 + $0x8] sm:$0xff]
    %v1231 = vld [vmem:[#allocation10 + $0x10] sm:$0xff]
    %v1232 = vld [vmem:[#allocation10 + $0x18] sm:$0x1]
    %s1233 = scalar_lea.vmem [#allocation9], 64
    %v1234 = vld [vmem:[%s1233] sm:$0xff]
    %v1235 = vld [vmem:[%s1233 + $0x8] sm:$0xff]
    %v1236 = vld [vmem:[%s1233 + $0x10] sm:$0xff]
    %v1237 = vld [vmem:[%s1233 + $0x18] sm:$0xff]
    %v1238 = vld [vmem:[%s1233 + $0x20] sm:$0xff]
    %v1239 = vld [vmem:[%s1233 + $0x28] sm:$0xff]
    %v1240 = vld [vmem:[%s1233 + $0x30] sm:$0xff]
    %v1241 = vld [vmem:[%s1233 + $0x38] sm:$0xff]
    %v1242 = vmul.f32 %v1184, %v1234
    %v1243 = vmul.f32 %v1185, %v1235
    %v1244 = vmul.f32 %v1186, %v1236
    %v1245 = vmul.f32 %v1187, %v1237
    %v1246 = vmul.f32 %v1188, %v1238
    %v1247 = vmul.f32 %v1189, %v1239
    %v1248 = vmul.f32 %v1190, %v1240
    %v1249 = vmul.f32 %v1191, %v1241
    %v1250 = vsel %vm983, %v1242, 0.0
    %v1251 = vsel %vm983, %v1243, 0.0
    %v1252 = vadd.f32 %v1250, %v1251
    %v1253 = vsel %vm983, %v1244, 0.0
    %v1254 = vadd.f32 %v1252, %v1253
    %v1255 = vsel %vm983, %v1245, 0.0
    %v1256 = vadd.f32 %v1254, %v1255
    %v1257 = vsel %vm983, %v1246, 0.0
    %v1258 = vadd.f32 %v1256, %v1257
    %v1259 = vsel %vm983, %v1247, 0.0
    %v1260 = vadd.f32 %v1258, %v1259
    %v1261 = vsel %vm983, %v1248, 0.0
    %v1262 = vadd.f32 %v1260, %v1261
    %v1263 = vsel %vm983, %v1249, 0.0
    %v1264 = vadd.f32 %v1262, %v1263
    %v1265 = vrot.slane %v1264, 4
    %v1266 = vadd.f32 %v1264, %v1265
    %v1267 = vrot.slane %v1266, 2
    %v1268 = vadd.f32 %v1266, %v1267
    %v1269 = vrot.slane %v1268, 1
    %v1270 = vadd.f32 %v1268, %v1269
    %s1271 = scalar_lea.vmem [#allocation10], 32
    %v1272 = vld [vmem:[%s1271] sm:$0xff]
    %v1273 = vld [vmem:[%s1271 + $0x8] sm:$0xff]
    %v1274 = vld [vmem:[%s1271 + $0x10] sm:$0xff]
    %v1275 = vld [vmem:[%s1271 + $0x18] sm:$0x1]
    %v1277 = vsel %vm983, %v1270, 0
    %v1280 = vsel %vm1012, %v1275, 0
    %1282 = vmatpush.msra.mxu0 0.0
    %1283 = vmatpush.msra.mxu0 0.0
    %1284 = vmatpush.msra.mxu0 0.0
    %1285 = vmatpush.msra.mxu0 0.0
    %1286 = vmatpush.msra.mxu0 0.0
    %1287 = vmatpush.msra.mxu0 0.0
    %1288 = vmatpush.msra.mxu0 0.0
    %1289 = vmatpush.msra.mxu0 0.0
    %1290 = vmatpush.msra.mxu0 0.0
    %1291 = vmatpush.msra.mxu0 0.0
    %1292 = vmatpush.msra.mxu0 0.0
    %1293 = vmatpush.msra.mxu0 0.0
    %1294 = vmatpush.msra.mxu0 %v1280
    %1295 = vmatpush.msra.mxu0 %v1274
    %1296 = vmatpush.msra.mxu0 %v1273
    %1297 = vmatpush.msra.mxu0 %v1272
    %1298 = vmatmul.f32.gmra.mxu0 %v1277
    %v1299 = vpop.f32.mrf.mxu0
    %v1300 = vadd.f32 0.0, %v1299
    %1301 = vdwg.mxu0
    %v1303 = vsel %vm983, %v1228, 0
    %v1306 = vsel %vm1012, %v1232, 0
    %1308 = vmatpush.msra.mxu0 0.0
    %1309 = vmatpush.msra.mxu0 0.0
    %1310 = vmatpush.msra.mxu0 0.0
    %1311 = vmatpush.msra.mxu0 0.0
    %1312 = vmatpush.msra.mxu0 0.0
    %1313 = vmatpush.msra.mxu0 0.0
    %1314 = vmatpush.msra.mxu0 0.0
    %1315 = vmatpush.msra.mxu0 0.0
    %1316 = vmatpush.msra.mxu0 0.0
    %1317 = vmatpush.msra.mxu0 0.0
    %1318 = vmatpush.msra.mxu0 0.0
    %1319 = vmatpush.msra.mxu0 0.0
    %1320 = vmatpush.msra.mxu0 %v1306
    %1321 = vmatpush.msra.mxu0 %v1231
    %1322 = vmatpush.msra.mxu0 %v1230
    %1323 = vmatpush.msra.mxu0 %v1229
    %1324 = vmatmul.f32.gmra.mxu0 %v1303
    %v1325 = vpop.f32.mrf.mxu0
    %v1326 = vadd.f32 %v1300, %v1325
    %1327 = vdwg.mxu0
    %s1328 = scalar_lea.vmem [#allocation9], 128
    %v1329 = vld [vmem:[%s1328] sm:$0xff]
    %v1330 = vld [vmem:[%s1328 + $0x8] sm:$0xff]
    %v1331 = vld [vmem:[%s1328 + $0x10] sm:$0xff]
    %v1332 = vld [vmem:[%s1328 + $0x18] sm:$0xff]
    %v1333 = vld [vmem:[%s1328 + $0x20] sm:$0xff]
    %v1334 = vld [vmem:[%s1328 + $0x28] sm:$0xff]
    %v1335 = vld [vmem:[%s1328 + $0x30] sm:$0xff]
    %v1336 = vld [vmem:[%s1328 + $0x38] sm:$0xff]
    %v1337 = vmul.f32 %v1184, %v1329
    %v1338 = vmul.f32 %v1185, %v1330
    %v1339 = vmul.f32 %v1186, %v1331
    %v1340 = vmul.f32 %v1187, %v1332
    %v1341 = vmul.f32 %v1188, %v1333
    %v1342 = vmul.f32 %v1189, %v1334
    %v1343 = vmul.f32 %v1190, %v1335
    %v1344 = vmul.f32 %v1191, %v1336
    %v1345 = vsel %vm983, %v1337, 0.0
    %v1346 = vsel %vm983, %v1338, 0.0
    %v1347 = vadd.f32 %v1345, %v1346
    %v1348 = vsel %vm983, %v1339, 0.0
    %v1349 = vadd.f32 %v1347, %v1348
    %v1350 = vsel %vm983, %v1340, 0.0
    %v1351 = vadd.f32 %v1349, %v1350
    %v1352 = vsel %vm983, %v1341, 0.0
    %v1353 = vadd.f32 %v1351, %v1352
    %v1354 = vsel %vm983, %v1342, 0.0
    %v1355 = vadd.f32 %v1353, %v1354
    %v1356 = vsel %vm983, %v1343, 0.0
    %v1357 = vadd.f32 %v1355, %v1356
    %v1358 = vsel %vm983, %v1344, 0.0
    %v1359 = vadd.f32 %v1357, %v1358
    %v1360 = vrot.slane %v1359, 4
    %v1361 = vadd.f32 %v1359, %v1360
    %v1362 = vrot.slane %v1361, 2
    %v1363 = vadd.f32 %v1361, %v1362
    %v1364 = vrot.slane %v1363, 1
    %v1365 = vadd.f32 %v1363, %v1364
    %s1366 = scalar_lea.vmem [#allocation10], 64
    %v1367 = vld [vmem:[%s1366] sm:$0xff]
    %v1368 = vld [vmem:[%s1366 + $0x8] sm:$0xff]
    %v1369 = vld [vmem:[%s1366 + $0x10] sm:$0xff]
    %v1370 = vld [vmem:[%s1366 + $0x18] sm:$0x1]
    %v1372 = vsel %vm983, %v1365, 0
    %v1375 = vsel %vm1012, %v1370, 0
    %1377 = vmatpush.msra.mxu0 0.0
    %1378 = vmatpush.msra.mxu0 0.0
    %1379 = vmatpush.msra.mxu0 0.0
    %1380 = vmatpush.msra.mxu0 0.0
    %1381 = vmatpush.msra.mxu0 0.0
    %1382 = vmatpush.msra.mxu0 0.0
    %1383 = vmatpush.msra.mxu0 0.0
    %1384 = vmatpush.msra.mxu0 0.0
    %1385 = vmatpush.msra.mxu0 0.0
    %1386 = vmatpush.msra.mxu0 0.0
    %1387 = vmatpush.msra.mxu0 0.0
    %1388 = vmatpush.msra.mxu0 0.0
    %1389 = vmatpush.msra.mxu0 %v1375
    %1390 = vmatpush.msra.mxu0 %v1369
    %1391 = vmatpush.msra.mxu0 %v1368
    %1392 = vmatpush.msra.mxu0 %v1367
    %1393 = vmatmul.f32.gmra.mxu0 %v1372
    %v1394 = vpop.f32.mrf.mxu0
    %v1395 = vadd.f32 0.0, %v1394
    %1396 = vdwg.mxu0
    %v1397 = vadd.f32 %v1326, %v1395
    %s1398 = scalar_lea.vmem [#allocation9], 192
    %v1399 = vld [vmem:[%s1398] sm:$0xff]
    %v1400 = vld [vmem:[%s1398 + $0x8] sm:$0xff]
    %v1401 = vld [vmem:[%s1398 + $0x10] sm:$0xff]
    %v1402 = vld [vmem:[%s1398 + $0x18] sm:$0xff]
    %v1403 = vld [vmem:[%s1398 + $0x20] sm:$0xff]
    %v1404 = vld [vmem:[%s1398 + $0x28] sm:$0xff]
    %v1405 = vld [vmem:[%s1398 + $0x30] sm:$0xff]
    %v1406 = vld [vmem:[%s1398 + $0x38] sm:$0xff]
    %v1407 = vmul.f32 %v1184, %v1399
    %v1408 = vmul.f32 %v1185, %v1400
    %v1409 = vmul.f32 %v1186, %v1401
    %v1410 = vmul.f32 %v1187, %v1402
    %v1411 = vmul.f32 %v1188, %v1403
    %v1412 = vmul.f32 %v1189, %v1404
    %v1413 = vmul.f32 %v1190, %v1405
    %v1414 = vmul.f32 %v1191, %v1406
    %v1415 = vsel %vm983, %v1407, 0.0
    %v1416 = vsel %vm983, %v1408, 0.0
    %v1417 = vadd.f32 %v1415, %v1416
    %v1418 = vsel %vm983, %v1409, 0.0
    %v1419 = vadd.f32 %v1417, %v1418
    %v1420 = vsel %vm983, %v1410, 0.0
    %v1421 = vadd.f32 %v1419, %v1420
    %v1422 = vsel %vm983, %v1411, 0.0
    %v1423 = vadd.f32 %v1421, %v1422
    %v1424 = vsel %vm983, %v1412, 0.0
    %v1425 = vadd.f32 %v1423, %v1424
    %v1426 = vsel %vm983, %v1413, 0.0
    %v1427 = vadd.f32 %v1425, %v1426
    %v1428 = vsel %vm983, %v1414, 0.0
    %v1429 = vadd.f32 %v1427, %v1428
    %v1430 = vrot.slane %v1429, 4
    %v1431 = vadd.f32 %v1429, %v1430
    %v1432 = vrot.slane %v1431, 2
    %v1433 = vadd.f32 %v1431, %v1432
    %v1434 = vrot.slane %v1433, 1
    %v1435 = vadd.f32 %v1433, %v1434
    %s1436 = scalar_lea.vmem [#allocation10], 96
    %v1437 = vld [vmem:[%s1436] sm:$0xff]
    %v1438 = vld [vmem:[%s1436 + $0x8] sm:$0xff]
    %v1439 = vld [vmem:[%s1436 + $0x10] sm:$0xff]
    %v1440 = vld [vmem:[%s1436 + $0x18] sm:$0x1]
    %v1442 = vsel %vm983, %v1435, 0
    %v1445 = vsel %vm1012, %v1440, 0
    %1447 = vmatpush.msra.mxu0 0.0
    %1448 = vmatpush.msra.mxu0 0.0
    %1449 = vmatpush.msra.mxu0 0.0
    %1450 = vmatpush.msra.mxu0 0.0
    %1451 = vmatpush.msra.mxu0 0.0
    %1452 = vmatpush.msra.mxu0 0.0
    %1453 = vmatpush.msra.mxu0 0.0
    %1454 = vmatpush.msra.mxu0 0.0
    %1455 = vmatpush.msra.mxu0 0.0
    %1456 = vmatpush.msra.mxu0 0.0
    %1457 = vmatpush.msra.mxu0 0.0
    %1458 = vmatpush.msra.mxu0 0.0
    %1459 = vmatpush.msra.mxu0 %v1445
    %1460 = vmatpush.msra.mxu0 %v1439
    %1461 = vmatpush.msra.mxu0 %v1438
    %1462 = vmatpush.msra.mxu0 %v1437
    %1463 = vmatmul.f32.gmra.mxu0 %v1442
    %v1464 = vpop.f32.mrf.mxu0
    %v1465 = vadd.f32 0.0, %v1464
    %1466 = vdwg.mxu0
    %v1467 = vadd.f32 %v1397, %v1465
    %vm1468 = vcmask 523264
    %v1470 = vsel %vm1468, %v1467, 0
    %1472 = vmatpush.msra.mxu0 0.0
    %1473 = vmatpush.msra.mxu0 0.0
    %1474 = vmatpush.msra.mxu0 0.0
    %1475 = vmatpush.msra.mxu0 0.0
    %1476 = vmatpush.msra.mxu0 0.0
    %1477 = vmatpush.msra.mxu0 0.0
    %1478 = vmatpush.msra.mxu0 0.0
    %1479 = vmatpush.msra.mxu0 0.0
    %1480 = vmatpush.msra.mxu0 %v837
    %1481 = vmatpush.msra.mxu0 %v836
    %1482 = vmatpush.msra.mxu0 %v835
    %1483 = vmatpush.msra.mxu0 %v834
    %1484 = vmatpush.msra.mxu0 %v833
    %1485 = vmatpush.msra.mxu0 %v832
    %1486 = vmatpush.msra.mxu0 %v831
    %1487 = vmatpush.msra.mxu0 %v830
    %1488 = vmatmul.f32.gmra.mxu0 %v1470
    %v1489 = vpop.f32.mrf.mxu0
    %v1490 = vadd.f32 0.0, %v1489
    %1491 = vdwg.mxu0
    %v1492 = vsel %vm983, %v975, -inf
    %v1493 = vsel %vm983, %v976, -inf
    %v1494 = vsel %vm983, %v977, -inf
    %v1495 = vsel %vm983, %v978, -inf
    %v1496 = vsel %vm983, %v979, -inf
    %v1497 = vmax.f32 %v1492, %v1496
    %v1498 = vsel %vm983, %v980, -inf
    %v1499 = vmax.f32 %v1493, %v1498
    %v1500 = vsel %vm983, %v981, -inf
    %v1501 = vmax.f32 %v1494, %v1500
    %v1502 = vsel %vm983, %v982, -inf
    %v1503 = vmax.f32 %v1495, %v1502
    %v1504 = vmax.f32 %v1497, %v1499
    %v1505 = vmax.f32 %v1501, %v1503
    %v1506 = vmax.f32 %v1504, %v1505
    %v1507 = vrot.slane %v1506, 4
    %v1508 = vmax.f32 %v1506, %v1507
    %v1509 = vrot.slane %v1508, 2
    %v1510 = vmax.f32 %v1508, %v1509
    %v1511 = vrot.slane %v1510, 1
    %v1512 = vmax.f32 %v1510, %v1511
    %v1514 = vsel %vm983, %v1512, 0
    %1516 = vmatpush.msra.mxu0 0.0
    %1517 = vmatpush.msra.mxu0 0.0
    %1518 = vmatpush.msra.mxu0 0.0
    %1519 = vmatpush.msra.mxu0 0.0
    %1520 = vmatpush.msra.mxu0 0.0
    %1521 = vmatpush.msra.mxu0 0.0
    %1522 = vmatpush.msra.mxu0 0.0
    %1523 = vmatpush.msra.mxu0 0.0
    %1524 = vmatpush.msra.mxu0 0.0
    %1525 = vmatpush.msra.mxu0 0.0
    %1526 = vmatpush.msra.mxu0 0.0
    %1527 = vmatpush.msra.mxu0 0.0
    %1528 = vmatpush.msra.mxu0 %v1014
    %1529 = vmatpush.msra.mxu0 %v1007
    %1530 = vmatpush.msra.mxu0 %v1006
    %1531 = vmatpush.msra.mxu0 %v1005
    %1532 = vmatmul.f32.gmra.mxu0 %v1514
    %v1533 = vpop.f32.mrf.mxu0
    %v1534 = vadd.f32 0.0, %v1533
    %1535 = vdwg.mxu0
    %s1537 = vtos %v1534
    %v1538 = vstv %s1537
    %v1540 = vmul.f32 %v1538, %v1036
    %v1541 = vmul.f32 %v1538, %v1037
    %v1542 = vmul.f32 %v1538, %v1038
    %v1543 = vmul.f32 %v1538, %v1039
    %v1544 = vmul.f32 %v1538, %v1040
    %v1545 = vmul.f32 %v1538, %v1041
    %v1546 = vmul.f32 %v1538, %v1042
    %v1547 = vmul.f32 %v1538, %v1043
    %v1548 = vadd.f32 %v1540, 0.0
    %v1549 = vadd.f32 %v1541, 0.0
    %v1550 = vadd.f32 %v1542, 0.0
    %v1551 = vadd.f32 %v1543, 0.0
    %v1552 = vadd.f32 %v1544, 0.0
    %v1553 = vadd.f32 %v1545, 0.0
    %v1554 = vadd.f32 %v1546, 0.0
    %v1555 = vadd.f32 %v1547, 0.0
    %1556 = vrot.lane.b32.xlu0 %v1534, 127
    %v1557 = vpop.permute.xlu0 %1556
    %s1558 = vtos %v1557
    %v1559 = vstv %s1558
    %v1561 = vmul.f32 %v1559, %v1065
    %v1562 = vmul.f32 %v1559, %v1066
    %v1563 = vmul.f32 %v1559, %v1067
    %v1564 = vmul.f32 %v1559, %v1068
    %v1565 = vmul.f32 %v1559, %v1069
    %v1566 = vmul.f32 %v1559, %v1070
    %v1567 = vmul.f32 %v1559, %v1071
    %v1568 = vmul.f32 %v1559, %v1072
    %v1569 = vadd.f32 %v1548, %v1561
    %v1570 = vadd.f32 %v1549, %v1562
    %v1571 = vadd.f32 %v1550, %v1563
    %v1572 = vadd.f32 %v1551, %v1564
    %v1573 = vadd.f32 %v1552, %v1565
    %v1574 = vadd.f32 %v1553, %v1566
    %v1575 = vadd.f32 %v1554, %v1567
    %v1576 = vadd.f32 %v1555, %v1568
    %1577 = vrot.lane.b32.xlu0 %v1534, 126
    %v1578 = vpop.permute.xlu0 %1577
    %s1579 = vtos %v1578
    %v1580 = vstv %s1579
    %v1582 = vmul.f32 %v1580, %v1095
    %v1583 = vmul.f32 %v1580, %v1096
    %v1584 = vmul.f32 %v1580, %v1097
    %v1585 = vmul.f32 %v1580, %v1098
    %v1586 = vmul.f32 %v1580, %v1099
    %v1587 = vmul.f32 %v1580, %v1100
    %v1588 = vmul.f32 %v1580, %v1101
    %v1589 = vmul.f32 %v1580, %v1102
    %v1590 = vadd.f32 %v1569, %v1582
    %v1591 = vadd.f32 %v1570, %v1583
    %v1592 = vadd.f32 %v1571, %v1584
    %v1593 = vadd.f32 %v1572, %v1585
    %v1594 = vadd.f32 %v1573, %v1586
    %v1595 = vadd.f32 %v1574, %v1587
    %v1596 = vadd.f32 %v1575, %v1588
    %v1597 = vadd.f32 %v1576, %v1589
    %1598 = vrot.lane.b32.xlu0 %v1534, 125
    %v1599 = vpop.permute.xlu0 %1598
    %s1600 = vtos %v1599
    %v1601 = vstv %s1600
    %v1603 = vmul.f32 %v1601, %v1125
    %v1604 = vmul.f32 %v1601, %v1126
    %v1605 = vmul.f32 %v1601, %v1127
    %v1606 = vmul.f32 %v1601, %v1128
    %v1607 = vmul.f32 %v1601, %v1129
    %v1608 = vmul.f32 %v1601, %v1130
    %v1609 = vmul.f32 %v1601, %v1131
    %v1610 = vmul.f32 %v1601, %v1132
    %v1611 = vadd.f32 %v1590, %v1603
    %v1612 = vadd.f32 %v1591, %v1604
    %v1613 = vadd.f32 %v1592, %v1605
    %v1614 = vadd.f32 %v1593, %v1606
    %v1615 = vadd.f32 %v1594, %v1607
    %v1616 = vadd.f32 %v1595, %v1608
    %v1617 = vadd.f32 %v1596, %v1609
    %v1618 = vadd.f32 %v1597, %v1610
    %1619 = vrot.lane.b32.xlu0 %v1534, 124
    %v1620 = vpop.permute.xlu0 %1619
    %s1621 = vtos %v1620
    %v1622 = vstv %s1621
    %v1624 = vmul.f32 %v1622, %v1155
    %v1625 = vmul.f32 %v1622, %v1156
    %v1626 = vmul.f32 %v1622, %v1157
    %v1627 = vmul.f32 %v1622, %v1158
    %v1628 = vmul.f32 %v1622, %v1159
    %v1629 = vmul.f32 %v1622, %v1160
    %v1630 = vmul.f32 %v1622, %v1161
    %v1631 = vmul.f32 %v1622, %v1162
    %v1632 = vadd.f32 %v1611, %v1624
    %v1633 = vadd.f32 %v1612, %v1625
    %v1634 = vadd.f32 %v1613, %v1626
    %v1635 = vadd.f32 %v1614, %v1627
    %v1636 = vadd.f32 %v1615, %v1628
    %v1637 = vadd.f32 %v1616, %v1629
    %v1638 = vadd.f32 %v1617, %v1630
    %v1639 = vadd.f32 %v1618, %v1631
    %v1640 = vmul.f32 %v975, %v1632
    %v1641 = vmul.f32 %v976, %v1633
    %v1642 = vmul.f32 %v977, %v1634
    %v1643 = vmul.f32 %v978, %v1635
    %v1644 = vmul.f32 %v979, %v1636
    %v1645 = vmul.f32 %v980, %v1637
    %v1646 = vmul.f32 %v981, %v1638
    %v1647 = vmul.f32 %v982, %v1639
    %v1648 = vmul.f32 %v1640, %v1192
    %v1649 = vmul.f32 %v1641, %v1193
    %v1650 = vmul.f32 %v1642, %v1194
    %v1651 = vmul.f32 %v1643, %v1195
    %v1652 = vmul.f32 %v1644, %v1196
    %v1653 = vmul.f32 %v1645, %v1197
    %v1654 = vmul.f32 %v1646, %v1198
    %v1655 = vmul.f32 %v1647, %v1199
    %v1656 = vsel %vm983, %v1648, 0.0
    %v1657 = vsel %vm983, %v1649, 0.0
    %v1658 = vadd.f32 %v1656, %v1657
    %v1659 = vsel %vm983, %v1650, 0.0
    %v1660 = vadd.f32 %v1658, %v1659
    %v1661 = vsel %vm983, %v1651, 0.0
    %v1662 = vadd.f32 %v1660, %v1661
    %v1663 = vsel %vm983, %v1652, 0.0
    %v1664 = vadd.f32 %v1662, %v1663
    %v1665 = vsel %vm983, %v1653, 0.0
    %v1666 = vadd.f32 %v1664, %v1665
    %v1667 = vsel %vm983, %v1654, 0.0
    %v1668 = vadd.f32 %v1666, %v1667
    %v1669 = vsel %vm983, %v1655, 0.0
    %v1670 = vadd.f32 %v1668, %v1669
    %v1671 = vrot.slane %v1670, 4
    %v1672 = vadd.f32 %v1670, %v1671
    %v1673 = vrot.slane %v1672, 2
    %v1674 = vadd.f32 %v1672, %v1673
    %v1675 = vrot.slane %v1674, 1
    %v1676 = vadd.f32 %v1674, %v1675
    %v1677 = vmul.f32 %v1640, %v1234
    %v1678 = vmul.f32 %v1641, %v1235
    %v1679 = vmul.f32 %v1642, %v1236
    %v1680 = vmul.f32 %v1643, %v1237
    %v1681 = vmul.f32 %v1644, %v1238
    %v1682 = vmul.f32 %v1645, %v1239
    %v1683 = vmul.f32 %v1646, %v1240
    %v1684 = vmul.f32 %v1647, %v1241
    %v1685 = vsel %vm983, %v1677, 0.0
    %v1686 = vsel %vm983, %v1678, 0.0
    %v1687 = vadd.f32 %v1685, %v1686
    %v1688 = vsel %vm983, %v1679, 0.0
    %v1689 = vadd.f32 %v1687, %v1688
    %v1690 = vsel %vm983, %v1680, 0.0
    %v1691 = vadd.f32 %v1689, %v1690
    %v1692 = vsel %vm983, %v1681, 0.0
    %v1693 = vadd.f32 %v1691, %v1692
    %v1694 = vsel %vm983, %v1682, 0.0
    %v1695 = vadd.f32 %v1693, %v1694
    %v1696 = vsel %vm983, %v1683, 0.0
    %v1697 = vadd.f32 %v1695, %v1696
    %v1698 = vsel %vm983, %v1684, 0.0
    %v1699 = vadd.f32 %v1697, %v1698
    %v1700 = vrot.slane %v1699, 4
    %v1701 = vadd.f32 %v1699, %v1700
    %v1702 = vrot.slane %v1701, 2
    %v1703 = vadd.f32 %v1701, %v1702
    %v1704 = vrot.slane %v1703, 1
    %v1705 = vadd.f32 %v1703, %v1704
    %v1707 = vsel %vm983, %v1705, 0
    %1709 = vmatpush.msra.mxu0 0.0
    %1710 = vmatpush.msra.mxu0 0.0
    %1711 = vmatpush.msra.mxu0 0.0
    %1712 = vmatpush.msra.mxu0 0.0
    %1713 = vmatpush.msra.mxu0 0.0
    %1714 = vmatpush.msra.mxu0 0.0
    %1715 = vmatpush.msra.mxu0 0.0
    %1716 = vmatpush.msra.mxu0 0.0
    %1717 = vmatpush.msra.mxu0 0.0
    %1718 = vmatpush.msra.mxu0 0.0
    %1719 = vmatpush.msra.mxu0 0.0
    %1720 = vmatpush.msra.mxu0 0.0
    %1721 = vmatpush.msra.mxu0 %v1280
    %1722 = vmatpush.msra.mxu0 %v1274
    %1723 = vmatpush.msra.mxu0 %v1273
    %1724 = vmatpush.msra.mxu0 %v1272
    %1725 = vmatmul.f32.gmra.mxu0 %v1707
    %v1726 = vpop.f32.mrf.mxu0
    %v1727 = vadd.f32 0.0, %v1726
    %1728 = vdwg.mxu0
    %v1730 = vsel %vm983, %v1676, 0
    %1732 = vmatpush.msra.mxu0 0.0
    %1733 = vmatpush.msra.mxu0 0.0
    %1734 = vmatpush.msra.mxu0 0.0
    %1735 = vmatpush.msra.mxu0 0.0
    %1736 = vmatpush.msra.mxu0 0.0
    %1737 = vmatpush.msra.mxu0 0.0
    %1738 = vmatpush.msra.mxu0 0.0
    %1739 = vmatpush.msra.mxu0 0.0
    %1740 = vmatpush.msra.mxu0 0.0
    %1741 = vmatpush.msra.mxu0 0.0
    %1742 = vmatpush.msra.mxu0 0.0
    %1743 = vmatpush.msra.mxu0 0.0
    %1744 = vmatpush.msra.mxu0 %v1306
    %1745 = vmatpush.msra.mxu0 %v1231
    %1746 = vmatpush.msra.mxu0 %v1230
    %1747 = vmatpush.msra.mxu0 %v1229
    %1748 = vmatmul.f32.gmra.mxu0 %v1730
    %v1749 = vpop.f32.mrf.mxu0
    %v1750 = vadd.f32 %v1727, %v1749
    %1751 = vdwg.mxu0
    %v1752 = vmul.f32 %v1640, %v1329
    %v1753 = vmul.f32 %v1641, %v1330
    %v1754 = vmul.f32 %v1642, %v1331
    %v1755 = vmul.f32 %v1643, %v1332
    %v1756 = vmul.f32 %v1644, %v1333
    %v1757 = vmul.f32 %v1645, %v1334
    %v1758 = vmul.f32 %v1646, %v1335
    %v1759 = vmul.f32 %v1647, %v1336
    %v1760 = vsel %vm983, %v1752, 0.0
    %v1761 = vsel %vm983, %v1753, 0.0
    %v1762 = vadd.f32 %v1760, %v1761
    %v1763 = vsel %vm983, %v1754, 0.0
    %v1764 = vadd.f32 %v1762, %v1763
    %v1765 = vsel %vm983, %v1755, 0.0
    %v1766 = vadd.f32 %v1764, %v1765
    %v1767 = vsel %vm983, %v1756, 0.0
    %v1768 = vadd.f32 %v1766, %v1767
    %v1769 = vsel %vm983, %v1757, 0.0
    %v1770 = vadd.f32 %v1768, %v1769
    %v1771 = vsel %vm983, %v1758, 0.0
    %v1772 = vadd.f32 %v1770, %v1771
    %v1773 = vsel %vm983, %v1759, 0.0
    %v1774 = vadd.f32 %v1772, %v1773
    %v1775 = vrot.slane %v1774, 4
    %v1776 = vadd.f32 %v1774, %v1775
    %v1777 = vrot.slane %v1776, 2
    %v1778 = vadd.f32 %v1776, %v1777
    %v1779 = vrot.slane %v1778, 1
    %v1780 = vadd.f32 %v1778, %v1779
    %v1782 = vsel %vm983, %v1780, 0
    %1784 = vmatpush.msra.mxu0 0.0
    %1785 = vmatpush.msra.mxu0 0.0
    %1786 = vmatpush.msra.mxu0 0.0
    %1787 = vmatpush.msra.mxu0 0.0
    %1788 = vmatpush.msra.mxu0 0.0
    %1789 = vmatpush.msra.mxu0 0.0
    %1790 = vmatpush.msra.mxu0 0.0
    %1791 = vmatpush.msra.mxu0 0.0
    %1792 = vmatpush.msra.mxu0 0.0
    %1793 = vmatpush.msra.mxu0 0.0
    %1794 = vmatpush.msra.mxu0 0.0
    %1795 = vmatpush.msra.mxu0 0.0
    %1796 = vmatpush.msra.mxu0 %v1375
    %1797 = vmatpush.msra.mxu0 %v1369
    %1798 = vmatpush.msra.mxu0 %v1368
    %1799 = vmatpush.msra.mxu0 %v1367
    %1800 = vmatmul.f32.gmra.mxu0 %v1782
    %v1801 = vpop.f32.mrf.mxu0
    %v1802 = vadd.f32 0.0, %v1801
    %1803 = vdwg.mxu0
    %v1804 = vadd.f32 %v1750, %v1802
    %v1805 = vmul.f32 %v1640, %v1399
    %v1806 = vmul.f32 %v1641, %v1400
    %v1807 = vmul.f32 %v1642, %v1401
    %v1808 = vmul.f32 %v1643, %v1402
    %v1809 = vmul.f32 %v1644, %v1403
    %v1810 = vmul.f32 %v1645, %v1404
    %v1811 = vmul.f32 %v1646, %v1405
    %v1812 = vmul.f32 %v1647, %v1406
    %v1813 = vsel %vm983, %v1805, 0.0
    %v1814 = vsel %vm983, %v1806, 0.0
    %v1815 = vadd.f32 %v1813, %v1814
    %v1816 = vsel %vm983, %v1807, 0.0
    %v1817 = vadd.f32 %v1815, %v1816
    %v1818 = vsel %vm983, %v1808, 0.0
    %v1819 = vadd.f32 %v1817, %v1818
    %v1820 = vsel %vm983, %v1809, 0.0
    %v1821 = vadd.f32 %v1819, %v1820
    %v1822 = vsel %vm983, %v1810, 0.0
    %v1823 = vadd.f32 %v1821, %v1822
    %v1824 = vsel %vm983, %v1811, 0.0
    %v1825 = vadd.f32 %v1823, %v1824
    %v1826 = vsel %vm983, %v1812, 0.0
    %v1827 = vadd.f32 %v1825, %v1826
    %v1828 = vrot.slane %v1827, 4
    %v1829 = vadd.f32 %v1827, %v1828
    %v1830 = vrot.slane %v1829, 2
    %v1831 = vadd.f32 %v1829, %v1830
    %v1832 = vrot.slane %v1831, 1
    %v1833 = vadd.f32 %v1831, %v1832
    %v1835 = vsel %vm983, %v1833, 0
    %1837 = vmatpush.msra.mxu0 0.0
    %1838 = vmatpush.msra.mxu0 0.0
    %1839 = vmatpush.msra.mxu0 0.0
    %1840 = vmatpush.msra.mxu0 0.0
    %1841 = vmatpush.msra.mxu0 0.0
    %1842 = vmatpush.msra.mxu0 0.0
    %1843 = vmatpush.msra.mxu0 0.0
    %1844 = vmatpush.msra.mxu0 0.0
    %1845 = vmatpush.msra.mxu0 0.0
    %1846 = vmatpush.msra.mxu0 0.0
    %1847 = vmatpush.msra.mxu0 0.0
    %1848 = vmatpush.msra.mxu0 0.0
    %1849 = vmatpush.msra.mxu0 %v1445
    %1850 = vmatpush.msra.mxu0 %v1439
    %1851 = vmatpush.msra.mxu0 %v1438
    %1852 = vmatpush.msra.mxu0 %v1437
    %1853 = vmatmul.f32.gmra.mxu0 %v1835
    %v1854 = vpop.f32.mrf.mxu0
    %v1855 = vadd.f32 0.0, %v1854
    %1856 = vdwg.mxu0
    %v1857 = vadd.f32 %v1804, %v1855
    %v1859 = vsel %vm1468, %v1857, 0
    %1861 = vmatpush.msra.mxu0 0.0
    %1862 = vmatpush.msra.mxu0 0.0
    %1863 = vmatpush.msra.mxu0 0.0
    %1864 = vmatpush.msra.mxu0 0.0
    %1865 = vmatpush.msra.mxu0 0.0
    %1866 = vmatpush.msra.mxu0 0.0
    %1867 = vmatpush.msra.mxu0 0.0
    %1868 = vmatpush.msra.mxu0 0.0
    %1869 = vmatpush.msra.mxu0 %v845
    %1870 = vmatpush.msra.mxu0 %v844
    %1871 = vmatpush.msra.mxu0 %v843
    %1872 = vmatpush.msra.mxu0 %v842
    %1873 = vmatpush.msra.mxu0 %v841
    %1874 = vmatpush.msra.mxu0 %v840
    %1875 = vmatpush.msra.mxu0 %v839
    %1876 = vmatpush.msra.mxu0 %v838
    %1877 = vmatmul.f32.gmra.mxu0 %v1859
    %v1878 = vpop.f32.mrf.mxu0
    %v1879 = vadd.f32 0.0, %v1878
    %1880 = vdwg.mxu0
    %v1882 = vrot.slane %v1879, 7
    %v1884 = vsel %vm1012, %v1490, %v1882
    %v1885 = vmul.f32 %v1884, 0.000625
    %v1886 = vld [vmem:[#allocation12] sm:$0xff]
    %v1887 = vld [vmem:[#allocation12 + $0x8] sm:$0xff]
    %v1888 = vld [vmem:[#allocation12 + $0x10] sm:$0xff]
    %v1889 = vld [vmem:[#allocation12 + $0x18] sm:$0xff]
    %v1890 = vld [vmem:[#allocation12 + $0x20] sm:$0xff]
    %v1891 = vld [vmem:[#allocation12 + $0x28] sm:$0xff]
    %v1892 = vld [vmem:[#allocation12 + $0x30] sm:$0xff]
    %v1893 = vld [vmem:[#allocation12 + $0x38] sm:$0xff]
    %v1894 = vld [vmem:[#allocation12 + $0x40] sm:$0xff]
    %v1895 = vld [vmem:[#allocation12 + $0x48] sm:$0xff]
    %v1896 = vld [vmem:[#allocation12 + $0x50] sm:$0xff]
    %v1897 = vld [vmem:[#allocation12 + $0x58] sm:$0xff]
    %v1898 = vld [vmem:[#allocation12 + $0x60] sm:$0xff]
    %v1899 = vld [vmem:[#allocation12 + $0x68] sm:$0xff]
    %v1900 = vld [vmem:[#allocation12 + $0x70] sm:$0xff]
    %v1901 = vld [vmem:[#allocation12 + $0x78] sm:$0xff]
    %v1902 = vld [vmem:[%s15] sm:$0x1]
    %v1904 = vperm.slane %v1902, 0
    %1906 = vmatpush.msra.mxu0 %v1901
    %1907 = vmatpush.msra.mxu0 %v1900
    %1908 = vmatpush.msra.mxu0 %v1899
    %1909 = vmatpush.msra.mxu0 %v1898
    %1910 = vmatpush.msra.mxu0 %v1897
    %1911 = vmatpush.msra.mxu0 %v1896
    %1912 = vmatpush.msra.mxu0 %v1895
    %1913 = vmatpush.msra.mxu0 %v1894
    %1914 = vmatpush.msra.mxu0 %v1893
    %1915 = vmatpush.msra.mxu0 %v1892
    %1916 = vmatpush.msra.mxu0 %v1891
    %1917 = vmatpush.msra.mxu0 %v1890
    %1918 = vmatpush.msra.mxu0 %v1889
    %1919 = vmatpush.msra.mxu0 %v1888
    %1920 = vmatpush.msra.mxu0 %v1887
    %1921 = vmatpush.msra.mxu0 %v1886
    %1922 = vmatmul.f32.gmra.mxu0 %v1885
    %v1923 = vpop.f32.mrf.mxu0
    %v1924 = vadd.f32 %v1904, %v1923
    %1925 = vdwg.mxu0
    %v1926 = vld [vmem:[%s17] sm:$0x1]
    %v1928 = vperm.slane %v1926, 0
    %v1930 = vmul.f32 %v1924, %v1928
    %v1931 = vsub.f32 1.0, %v1926
    %v1932 = vmul.f32 %v1931, 1e+30
    %v1934 = vperm.slane %v1932, 0
    %v1936 = vsub.f32 %v1930, %v1934
    %v1937 = vsel %vm386, %v1936, -inf
    %1938 = vmax.xlane.f32.xlu0 %v1937
    %v1939 = vpop.xlane.xlu0 %1938
    %v1940 = vsub.f32 %v1936, %v1939
    %v1941 = vmul.f32 %v1940, 1.442695
    %v1942 = vpow.pop %v1941
    %v1943 = vmul.f32 %v1942, %v1928
    %v1944 = vld [vmem:[#allocation13] sm:$0xff]
    %v1945 = vld [vmem:[#allocation13 + $0x8] sm:$0xff]
    %v1946 = vld [vmem:[#allocation13 + $0x10] sm:$0xff]
    %v1947 = vld [vmem:[#allocation13 + $0x18] sm:$0xff]
    %v1948 = vld [vmem:[#allocation13 + $0x20] sm:$0xff]
    %v1949 = vld [vmem:[#allocation13 + $0x28] sm:$0xff]
    %v1950 = vld [vmem:[#allocation13 + $0x30] sm:$0xff]
    %v1951 = vld [vmem:[#allocation13 + $0x38] sm:$0xff]
    %v1952 = vld [vmem:[#allocation13 + $0x40] sm:$0xff]
    %v1953 = vld [vmem:[#allocation13 + $0x48] sm:$0xff]
    %v1954 = vld [vmem:[#allocation13 + $0x50] sm:$0xff]
    %v1955 = vld [vmem:[#allocation13 + $0x58] sm:$0xff]
    %v1956 = vld [vmem:[#allocation13 + $0x60] sm:$0xff]
    %v1957 = vld [vmem:[#allocation13 + $0x68] sm:$0xff]
    %v1958 = vld [vmem:[#allocation13 + $0x70] sm:$0xff]
    %v1959 = vld [vmem:[#allocation13 + $0x78] sm:$0xff]
    %v1961 = vperm.slane %v1931, 0
    %1963 = vmatpush.msra.mxu0 %v1959
    %1964 = vmatpush.msra.mxu0 %v1958
    %1965 = vmatpush.msra.mxu0 %v1957
    %1966 = vmatpush.msra.mxu0 %v1956
    %1967 = vmatpush.msra.mxu0 %v1955
    %1968 = vmatpush.msra.mxu0 %v1954
    %1969 = vmatpush.msra.mxu0 %v1953
    %1970 = vmatpush.msra.mxu0 %v1952
    %1971 = vmatpush.msra.mxu0 %v1951
    %1972 = vmatpush.msra.mxu0 %v1950
    %1973 = vmatpush.msra.mxu0 %v1949
    %1974 = vmatpush.msra.mxu0 %v1948
    %1975 = vmatpush.msra.mxu0 %v1947
    %1976 = vmatpush.msra.mxu0 %v1946
    %1977 = vmatpush.msra.mxu0 %v1945
    %1978 = vmatpush.msra.mxu0 %v1944
    %1979 = vmatmul.f32.gmra.mxu0 %v1943
    %v1980 = vpop.f32.mrf.mxu0
    %v1981 = vadd.f32 %v1961, %v1980
    %1982 = vdwg.mxu0
    %v1983 = vrcp.pop %v1981
    %v1984 = vmul.f32 %v1981, %v1983
    %v1985 = vsub.f32 1.0, %v1984
    %v1986 = vmul.f32 %v1983, %v1985
    %v1987 = vadd.f32 %v1983, %v1986
    %vm1988 = vweird.f32 %v1981
    %vm1989 = vweird.f32 %v1983
    %vm1990 = vmor %vm1988, %vm1989
    %v1991 = vsel %vm1990, %v1983, %v1987
    %v1992 = vand.u32 2147483647, %v1981
    %vm1993 = vcmp.eq.f32.partialorder %v1992, 8.507059e+37
    %v1994 = vand.u32 %v1981, 2147483648
    %v1995 = vor.u32 1.1754944e-38, %v1994
    %v1996 = vsel %vm1993, %v1995, %v1991
    %v1997 = vmul.f32 %v1943, %v1996
    %1998 = vst [vmem:[%s18] sm:$0x3] %v1997
    // Predicated region
    $region106: #{cabnetpp_forward.1} parent=1 // pred_check
      _
    $region107: #{cabnetpp_forward.1} parent=1 // pred_check_branch
      %2000 = sbr.rel (0) target = $region109
    $region108: #{cabnetpp_forward.1} parent=1 // pred_region
      _
    $region109: #{cabnetpp_forward.1} parent=1 // pred_fallthru
      _
    // Predicated region
    $region110: #{cabnetpp_forward.1} parent=1 // pred_check
      _
    $region111: #{cabnetpp_forward.1} parent=1 // pred_check_branch
      %2002 = sbr.rel (0) target = $region113
    $region112: #{cabnetpp_forward.1} parent=1 // pred_region
      _
    $region113: #{cabnetpp_forward.1} parent=1 // pred_fallthru
      _
    %2003 = vsyncpa [#allocation3], 1
    %2004 = vsyncpa [#allocation5], 1
    %2005 = vsyncpa [#allocation8], 1
    %2006 = vsyncpa [#allocation11], 1
    %2007 = vsyncpa [#allocation14], 1

</llo_original>
